<compile_context>
chip_gen: v6e
topology: v6e:2x2x1
jax: 0.10.0
libtpu: 0.0.40
codegen_flags: <defaults>
</compile_context>

<pallas_src>
import math
import functools

import jax
import jax.numpy as jnp
from jax import lax
from jax.experimental import pallas as pl
from jax.experimental.pallas import tpu as pltpu


def _att_sublayer_kernel(
    x_ref,      # (1, L, D)        full-sequence input (LN+QKV at i==0, residual rows per tile)
    gb_ref,     # (1, TQ, L)       gaussian-bias tile (f32 or bf16)
    mask_ref,   # (1, TQ, 1)       non_pad_mask tile (f32)
    wqkv_ref,   # (D, 2*d_k+d_v)   fused projection weight (matmul dtype, q cols pre-scaled)
    bqkv_ref,   # (1, 2*d_k+d_v)   fused projection bias (f32, q cols pre-scaled)
    wfc_ref,    # (d_v, D)         output projection weight (matmul dtype)
    bfc_ref,    # (1, D)
    lnw_ref,    # (1, D)           layer-norm gamma
    lnb_ref,    # (1, D)           layer-norm beta
    o_ref,      # (1, TQ, D)
    q_scr,      # (L, d_k)         persistent VMEM scratch (matmul dtype)
    k_scr,      # (L, d_k)
    v_scr,      # (L, d_v)
    *,
    gb_scale: float,
    d_k: int,
    d_v: int,
    block_q: int,
):
    cdt = wqkv_ref.dtype                      # matmul operand dtype (f32 or bf16)
    i = pl.program_id(1)
    row0 = pl.multiple_of(i * block_q, block_q)

    # --- once per batch: LayerNorm (f32, eps=1e-5) + fused QKV projection -> scratch ---
    @pl.when(i == 0)
    def _():
        x_full = x_ref[0]                                   # (L, D)
        mu = jnp.mean(x_full, axis=-1, keepdims=True)
        xc = x_full - mu
        var = jnp.mean(xc * xc, axis=-1, keepdims=True)
        xn = xc * lax.rsqrt(var + 1e-5) * lnw_ref[...] + lnb_ref[...]
        qkv = jnp.dot(xn.astype(cdt), wqkv_ref[...],
                      preferred_element_type=jnp.float32) + bqkv_ref[...]  # (L, 2dk+dv) f32
        q_scr[...] = qkv[:, :d_k].astype(cdt)               # already /temperature (folded)
        k_scr[...] = qkv[:, d_k:2 * d_k].astype(cdt)
        v_scr[...] = qkv[:, 2 * d_k:].astype(cdt)

    # --- per query tile: scores (NT matmul, f32 accumulation) + gaussian bias ---
    q = q_scr[pl.ds(row0, block_q), :]                      # (TQ, d_k)
    attn = lax.dot_general(q, k_scr[...],
                           dimension_numbers=(((1,), (1,)), ((), ())),
                           preferred_element_type=jnp.float32)            # (TQ, L)
    attn = attn + gb_ref[0].astype(jnp.float32) * gb_scale  # multiply, not divide

    # --- softmax over keys (f32; EUP approx reciprocal for the denominator) ---
    m = jnp.max(attn, axis=-1, keepdims=True)
    p = jnp.exp(attn - m)
    p = p * pl.reciprocal(jnp.sum(p, axis=-1, keepdims=True), approx=True)

    # --- weighted values + output projection ---
    out = jnp.dot(p.astype(cdt), v_scr[...],
                  preferred_element_type=jnp.float32)                     # (TQ, d_v)
    out = jnp.dot(out.astype(cdt), wfc_ref[...],
                  preferred_element_type=jnp.float32) + bfc_ref[...]      # (TQ, D)

    # --- residual add, sqrt(0.5) scale, non-pad mask ---
    residual = x_ref[0, pl.ds(row0, block_q), :]
    out = (out + residual) * math.sqrt(0.5)
    out = out * mask_ref[0]                                 # broadcast (TQ, 1)
    o_ref[0] = out.astype(o_ref.dtype)


def _vmem_capacity_bytes() -> int:
    try:
        info = pltpu.get_tpu_info()
        cap = int(getattr(info, "vmem_capacity_bytes", 0))
        if cap > 0:
            return cap
    except Exception:
        pass
    return 128 * 1024 * 1024


def att_sublayer_block(x, g_bias, non_pad_mask, params, d_k, d_v,
                       *, block_q=None, matmul_dtype=jnp.float32,
                       gbias_dtype=jnp.bfloat16):
    """x: (B, L, D) f32, g_bias: (B, L, L), non_pad_mask: (B, L, 1) f32."""
    B, L, D = x.shape
    dqkv = 2 * d_k + d_v

    vmem_cap = _vmem_capacity_bytes()
    small_vmem = vmem_cap <= (64 << 20)          # v7x-class parts
    if block_q is None:
        if L <= 256:
            block_q = L
        else:
            block_q = 128 if small_vmem else 256
    assert L % block_q == 0, "block_q must divide the sequence length"
    n_q = L // block_q
    vmem_limit = (48 << 20) if small_vmem else (80 << 20)

    inv_temperature = 1.0 / (float(d_k) ** 0.5)
    tau = float(params["tau"])
    gb_scale = 1.0 / (2.0 * tau * tau)

    # Fuse the projections (weights pre-transposed to (in, out) so the kernel
    # computes y = x @ W + b). 1/temperature is folded into the q columns.
    w_qkv = jnp.concatenate(
        [params["w_q"] * inv_temperature, params["w_k"], params["w_v"]],
        axis=1).astype(matmul_dtype)
    b_qkv = jnp.concatenate(
        [params["b_q"] * inv_temperature, params["b_k"], params["b_v"]],
        axis=1).astype(jnp.float32)
    w_fc = params["w_fc"].astype(matmul_dtype)

    gb = g_bias.astype(gbias_dtype)              # halve the dominant HBM stream

    kernel = functools.partial(
        _att_sublayer_kernel,
        gb_scale=gb_scale, d_k=d_k, d_v=d_v, block_q=block_q,
    )

    def build(single_buffer_weights: bool):
        if single_buffer_weights:
            wspec = lambda shp: pl.BlockSpec(shp, lambda b, i: (0, 0),
                                             pipeline_mode=pl.Buffered(1))
        else:
            wspec = lambda shp: pl.BlockSpec(shp, lambda b, i: (0, 0))
        return pl.pallas_call(
            kernel,
            out_shape=jax.ShapeDtypeStruct((B, L, D), x.dtype),
            grid_spec=pltpu.PrefetchScalarGridSpec(
                num_scalar_prefetch=0,
                grid=(B, n_q),
                in_specs=[
                    pl.BlockSpec((1, L, D), lambda b, i: (b, 0, 0)),       # x (full seq)
                    pl.BlockSpec((1, block_q, L), lambda b, i: (b, i, 0)), # g_bias tile
                    pl.BlockSpec((1, block_q, 1), lambda b, i: (b, i, 0)), # non_pad_mask tile
                    wspec((D, dqkv)),        # w_qkv (fused, grid-invariant)
                    wspec((1, dqkv)),        # b_qkv
                    wspec((d_v, D)),         # w_fc
                    wspec((1, D)),           # b_fc
                    wspec((1, D)),           # ln gamma
                    wspec((1, D)),           # ln beta
                ],
                out_specs=pl.BlockSpec((1, block_q, D), lambda b, i: (b, i, 0)),
                scratch_shapes=[
                    pltpu.VMEM((L, d_k), matmul_dtype),   # q (pre-scaled)
                    pltpu.VMEM((L, d_k), matmul_dtype),   # k
                    pltpu.VMEM((L, d_v), matmul_dtype),   # v
                ],
            ),
            compiler_params=pltpu.CompilerParams(
                # batch axis parallel (megacore); q-tile axis arbitrary so the
                # once-per-batch scratch initialization is sound.
                dimension_semantics=("parallel", "arbitrary"),
                vmem_limit_bytes=vmem_limit,
            ),
        )

    args = (x, gb, non_pad_mask, w_qkv, b_qkv, w_fc,
            params["b_fc"], params["ln_w"], params["ln_b"])
    try:
        return build(single_buffer_weights=True)(*args)
    except Exception:
        # Fallback for Pallas versions that reject Buffered(1) on these specs.
        return build(single_buffer_weights=False)(*args)


def _reference(x, g_bias, non_pad_mask, params, d_k, d_v):
    """Pure-JAX reference mirroring the PyTorch forward (eval mode)."""
    temperature = float(d_k) ** 0.5
    tau = params["tau"]
    residual = x
    mu = jnp.mean(x, axis=-1, keepdims=True)
    var = jnp.mean((x - mu) ** 2, axis=-1, keepdims=True)
    xn = (x - mu) / jnp.sqrt(var + 1e-5) * params["ln_w"] + params["ln_b"]
    q = xn @ params["w_q"] + params["b_q"]
    k = xn @ params["w_k"] + params["b_k"]
    v = xn @ params["w_v"] + params["b_v"]
    attn = jnp.einsum("bqd,bkd->bqk", q, k) / temperature
    attn = attn + g_bias / (2.0 * tau * tau)
    attn = jax.nn.softmax(attn, axis=-1)
    out = jnp.einsum("bqk,bkd->bqd", attn, v) @ params["w_fc"] + params["b_fc"]
    out = (out + residual) * math.sqrt(0.5)
    return out * non_pad_mask


def init_params(key, d_model, d_k, d_v):
    ks = jax.random.split(key, 8)
    std_qk = math.sqrt(2.0 / (d_model + d_k))
    std_v = math.sqrt(2.0 / (d_model + d_v))
    bound_fc = math.sqrt(6.0 / (d_v + d_model))       # xavier_uniform, linear gain
    bq_bound = 1.0 / math.sqrt(d_model)               # nn.Linear default bias init
    bf_bound = 1.0 / math.sqrt(d_v)
    f32 = jnp.float32
    return {
        # stored as (in_dim, out_dim) so the kernel computes x @ W
        "w_q": (jax.random.normal(ks[0], (d_model, d_k)) * std_qk).astype(f32),
        "w_k": (jax.random.normal(ks[1], (d_model, d_k)) * std_qk).astype(f32),
        "w_v": (jax.random.normal(ks[2], (d_model, d_v)) * std_v).astype(f32),
        "b_q": jax.random.uniform(ks[3], (1, d_k), minval=-bq_bound, maxval=bq_bound).astype(f32),
        "b_k": jax.random.uniform(ks[4], (1, d_k), minval=-bq_bound, maxval=bq_bound).astype(f32),
        "b_v": jax.random.uniform(ks[5], (1, d_v), minval=-bq_bound, maxval=bq_bound).astype(f32),
        "w_fc": jax.random.uniform(ks[6], (d_v, d_model), minval=-bound_fc, maxval=bound_fc).astype(f32),
        "b_fc": jax.random.uniform(ks[7], (1, d_model), minval=-bf_bound, maxval=bf_bound).astype(f32),
        "ln_w": jnp.ones((1, d_model), f32),
        "ln_b": jnp.zeros((1, d_model), f32),
        "tau": jnp.float32(30.0),                      # nn.Parameter(torch.tensor(30.0))
    }


if __name__ == "__main__":
    B, L, d_model, d_k, d_v = 2, 8, 32, 16, 16

    key = jax.random.PRNGKey(0)
    k_x, k_g, k_m, k_p = jax.random.split(key, 4)

    x = jax.random.normal(k_x, (B, L, d_model), dtype=jnp.float32)
    g_bias = -jnp.abs(jax.random.normal(k_g, (B, L, L), dtype=jnp.float32))
    non_pad_mask = jnp.ones((B, L, 1), dtype=jnp.float32).at[1, -1, 0].set(0.0)

    params = init_params(k_p, d_model, d_k, d_v)
    ref = _reference(x, g_bias, non_pad_mask, params, d_k, d_v)

    # f32 matmul operands + f32 g_bias: tight check (approx reciprocal +
    # reassociation are the only deviations; documented as intentional).
    out_f32 = att_sublayer_block(x, g_bias, non_pad_mask, params, d_k, d_v,
                                 matmul_dtype=jnp.float32,
                                 gbias_dtype=jnp.float32)
    out_f32 = jax.block_until_ready(out_f32)
    assert out_f32.shape == (B, L, d_model)
    assert jnp.allclose(out_f32, ref, rtol=1e-2, atol=1e-2), "f32 kernel mismatch vs reference"

    # Default fast path: bf16 matmul operands + bf16 g_bias (f32 accumulation).
    out_bf16 = att_sublayer_block(x, g_bias, non_pad_mask, params, d_k, d_v,
                                  matmul_dtype=jnp.bfloat16,
                                  gbias_dtype=jnp.bfloat16)
    out_bf16 = jax.block_until_ready(out_bf16)
    assert out_bf16.shape == (B, L, d_model)
    assert jnp.allclose(out_bf16, ref, rtol=1e-1, atol=1e-1), "bf16 kernel mismatch vs reference"

    print("KERNEL_OK")
</pallas_src>

<mosaic_0001>
module attributes {stable_mosaic.version = 11 : i64} {
  func.func @_att_sublayer_kernel(%arg0: i32, %arg1: i32, %arg2: memref<1x8x32xf32, #tpu.memory_space<vmem>>, %arg3: memref<1x8x8xf32, #tpu.memory_space<vmem>>, %arg4: memref<1x8x1xf32, #tpu.memory_space<vmem>>, %arg5: memref<32x48xf32, #tpu.memory_space<vmem>>, %arg6: memref<1x48xf32, #tpu.memory_space<vmem>>, %arg7: memref<16x32xf32, #tpu.memory_space<vmem>>, %arg8: memref<1x32xf32, #tpu.memory_space<vmem>>, %arg9: memref<1x32xf32, #tpu.memory_space<vmem>>, %arg10: memref<1x32xf32, #tpu.memory_space<vmem>>, %arg11: memref<1x8x32xf32, #tpu.memory_space<vmem>>, %arg12: memref<8x16xf32, #tpu.memory_space<vmem>>, %arg13: memref<8x16xf32, #tpu.memory_space<vmem>>, %arg14: memref<8x16xf32, #tpu.memory_space<vmem>>) attributes {dimension_semantics = [#tpu.dimension_semantics<parallel>, #tpu.dimension_semantics<arbitrary>], iteration_bounds = array<i64: 2, 1>, scalar_prefetch = 0 : i64, scratch_operands = 3 : i64, tpu.core_type = #tpu.core_type<tc>, window_params = [{transform_indices = @transform_0, window_bounds = array<i64: 1, 8, 32>}, {transform_indices = @transform_1, window_bounds = array<i64: 1, 8, 8>}, {transform_indices = @transform_2, window_bounds = array<i64: 1, 8, 1>}, {pipeline_mode = #tpu.pipeline_mode<synchronous>, transform_indices = @transform_3, window_bounds = array<i64: 32, 48>}, {pipeline_mode = #tpu.pipeline_mode<synchronous>, transform_indices = @transform_4, window_bounds = array<i64: 1, 48>}, {pipeline_mode = #tpu.pipeline_mode<synchronous>, transform_indices = @transform_5, window_bounds = array<i64: 16, 32>}, {pipeline_mode = #tpu.pipeline_mode<synchronous>, transform_indices = @transform_6, window_bounds = array<i64: 1, 32>}, {pipeline_mode = #tpu.pipeline_mode<synchronous>, transform_indices = @transform_7, window_bounds = array<i64: 1, 32>}, {pipeline_mode = #tpu.pipeline_mode<synchronous>, transform_indices = @transform_8, window_bounds = array<i64: 1, 32>}, {transform_indices = @transform_9, window_bounds = array<i64: 1, 8, 32>}]} {
    %c8_i32 = arith.constant 8 : i32
    %0 = arith.muli %arg1, %c8_i32 : i32
    %1 = tpu.assume_multiple %0, 8 : i32
    %c0_i32 = arith.constant 0 : i32
    %2 = arith.cmpi eq, %arg1, %c0_i32 : i32
    %3 = arith.extui %2 : i1 to i32
    %c0_i32_0 = arith.constant 0 : i32
    %4 = arith.cmpi ne, %3, %c0_i32_0 : i32
    scf.if %4 {
      %c0_26 = arith.constant 0 : index
      %c0_27 = arith.constant 0 : index
      %c0_28 = arith.constant 0 : index
      %44 = vector.load %arg2[%c0_26, %c0_27, %c0_28] : memref<1x8x32xf32, #tpu.memory_space<vmem>>, vector<1x8x32xf32>
      %45 = vector.shape_cast %44 : vector<1x8x32xf32> to vector<8x32xf32>
      %cst_29 = arith.constant dense<0.000000e+00> : vector<8xf32>
      %46 = vector.multi_reduction <add>, %45, %cst_29 [1] : vector<8x32xf32> to vector<8xf32>
      %47 = vector.shape_cast %46 : vector<8xf32> to vector<8x1xf32>
      %cst_30 = arith.constant 3.200000e+01 : f32
      %48 = vector.broadcast %cst_30 : f32 to vector<8x1xf32>
      %49 = arith.divf %47, %48 : vector<8x1xf32>
      %50 = vector.broadcast %49 : vector<8x1xf32> to vector<8x32xf32>
      %51 = arith.subf %45, %50 : vector<8x32xf32>
      %52 = arith.mulf %51, %51 : vector<8x32xf32>
      %cst_31 = arith.constant dense<0.000000e+00> : vector<8xf32>
      %53 = vector.multi_reduction <add>, %52, %cst_31 [1] : vector<8x32xf32> to vector<8xf32>
      %54 = vector.shape_cast %53 : vector<8xf32> to vector<8x1xf32>
      %cst_32 = arith.constant 3.200000e+01 : f32
      %55 = vector.broadcast %cst_32 : f32 to vector<8x1xf32>
      %56 = arith.divf %54, %55 : vector<8x1xf32>
      %cst_33 = arith.constant 9.99999974E-6 : f32
      %57 = vector.broadcast %cst_33 : f32 to vector<8x1xf32>
      %58 = arith.addf %56, %57 : vector<8x1xf32>
      %59 = math.rsqrt %58 : vector<8x1xf32>
      %60 = vector.broadcast %59 : vector<8x1xf32> to vector<8x32xf32>
      %61 = arith.mulf %51, %60 : vector<8x32xf32>
      %c0_34 = arith.constant 0 : index
      %c0_35 = arith.constant 0 : index
      %62 = vector.load %arg9[%c0_34, %c0_35] : memref<1x32xf32, #tpu.memory_space<vmem>>, vector<1x32xf32>
      %63 = vector.broadcast %62 : vector<1x32xf32> to vector<8x32xf32>
      %64 = arith.mulf %61, %63 : vector<8x32xf32>
      %c0_36 = arith.constant 0 : index
      %c0_37 = arith.constant 0 : index
      %65 = vector.load %arg10[%c0_36, %c0_37] : memref<1x32xf32, #tpu.memory_space<vmem>>, vector<1x32xf32>
      %66 = vector.broadcast %65 : vector<1x32xf32> to vector<8x32xf32>
      %67 = arith.addf %64, %66 : vector<8x32xf32>
      %c0_38 = arith.constant 0 : index
      %c0_39 = arith.constant 0 : index
      %68 = vector.load %arg5[%c0_38, %c0_39] : memref<32x48xf32, #tpu.memory_space<vmem>>, vector<32x48xf32>
      %cst_40 = arith.constant dense<0.000000e+00> : vector<8x48xf32>
      %69 = tpu.matmul %67, %68, %cst_40 {dimension_numbers = #tpu.dot_dimension_numbers<[1], [0], [0], [1], [0, 0, 1, 1], [], []>} : vector<8x32xf32>, vector<32x48xf32>, vector<8x48xf32> -> vector<8x48xf32>
      %c0_41 = arith.constant 0 : index
      %c0_42 = arith.constant 0 : index
      %70 = vector.load %arg6[%c0_41, %c0_42] : memref<1x48xf32, #tpu.memory_space<vmem>>, vector<1x48xf32>
      %71 = vector.broadcast %70 : vector<1x48xf32> to vector<8x48xf32>
      %72 = arith.addf %69, %71 : vector<8x48xf32>
      %73 = vector.extract_strided_slice %72 {offsets = [0, 0], sizes = [8, 16], strides = [1, 1]} : vector<8x48xf32> to vector<8x16xf32>
      %c0_43 = arith.constant 0 : index
      %c0_44 = arith.constant 0 : index
      %74 = vector.load %arg12[%c0_43, %c0_44] : memref<8x16xf32, #tpu.memory_space<vmem>>, vector<8x16xf32>
      tpu.vector_store %arg12[%c0_43, %c0_44], %73 {strides = array<i32>} : memref<8x16xf32, #tpu.memory_space<vmem>>, vector<8x16xf32>,
      %75 = vector.extract_strided_slice %72 {offsets = [0, 16], sizes = [8, 16], strides = [1, 1]} : vector<8x48xf32> to vector<8x16xf32>
      %c0_45 = arith.constant 0 : index
      %c0_46 = arith.constant 0 : index
      %76 = vector.load %arg13[%c0_45, %c0_46] : memref<8x16xf32, #tpu.memory_space<vmem>>, vector<8x16xf32>
      tpu.vector_store %arg13[%c0_45, %c0_46], %75 {strides = array<i32>} : memref<8x16xf32, #tpu.memory_space<vmem>>, vector<8x16xf32>,
      %77 = vector.extract_strided_slice %72 {offsets = [0, 32], sizes = [8, 16], strides = [1, 1]} : vector<8x48xf32> to vector<8x16xf32>
      %c0_47 = arith.constant 0 : index
      %c0_48 = arith.constant 0 : index
      %78 = vector.load %arg14[%c0_47, %c0_48] : memref<8x16xf32, #tpu.memory_space<vmem>>, vector<8x16xf32>
      tpu.vector_store %arg14[%c0_47, %c0_48], %77 {strides = array<i32>} : memref<8x16xf32, #tpu.memory_space<vmem>>, vector<8x16xf32>,
    } else {
    }
    %5 = arith.index_cast %1 : i32 to index
    %c0 = arith.constant 0 : index
    %6 = vector.load %arg12[%5, %c0] : memref<8x16xf32, #tpu.memory_space<vmem>>, vector<8x16xf32>
    %c0_1 = arith.constant 0 : index
    %c0_2 = arith.constant 0 : index
    %7 = vector.load %arg13[%c0_1, %c0_2] : memref<8x16xf32, #tpu.memory_space<vmem>>, vector<8x16xf32>
    %cst = arith.constant dense<0.000000e+00> : vector<8x8xf32>
    %8 = tpu.matmul %6, %7, %cst {dimension_numbers = #tpu.dot_dimension_numbers<[1], [1], [0], [0], [0, 0, 1, 0], [], []>} : vector<8x16xf32>, vector<8x16xf32>, vector<8x8xf32> -> vector<8x8xf32>
    %c0_3 = arith.constant 0 : index
    %c0_4 = arith.constant 0 : index
    %c0_5 = arith.constant 0 : index
    %9 = vector.load %arg3[%c0_3, %c0_4, %c0_5] : memref<1x8x8xf32, #tpu.memory_space<vmem>>, vector<1x8x8xf32>
    %10 = vector.shape_cast %9 : vector<1x8x8xf32> to vector<8x8xf32>
    %cst_6 = arith.constant 5.55555569E-4 : f32
    %11 = vector.broadcast %cst_6 : f32 to vector<8x8xf32>
    %12 = arith.mulf %10, %11 : vector<8x8xf32>
    %13 = arith.addf %8, %12 : vector<8x8xf32>
    %cst_7 = arith.constant dense<0xFF800000> : vector<8xf32>
    %14 = vector.multi_reduction <maximumf>, %13, %cst_7 [1] : vector<8x8xf32> to vector<8xf32>
    %15 = vector.shape_cast %14 : vector<8xf32> to vector<8x1xf32>
    %16 = vector.broadcast %15 : vector<8x1xf32> to vector<8x8xf32>
    %17 = arith.subf %13, %16 : vector<8x8xf32>
    %18 = math.exp %17 : vector<8x8xf32>
    %cst_8 = arith.constant dense<0.000000e+00> : vector<8xf32>
    %19 = vector.multi_reduction <add>, %18, %cst_8 [1] : vector<8x8xf32> to vector<8xf32>
    %20 = vector.shape_cast %19 : vector<8xf32> to vector<8x1xf32>
    %21 = tpu.reciprocal %20 {approx = true} : vector<8x1xf32> -> vector<8x1xf32>
    %22 = vector.broadcast %21 : vector<8x1xf32> to vector<8x8xf32>
    %23 = arith.mulf %18, %22 : vector<8x8xf32>
    %c0_9 = arith.constant 0 : index
    %c0_10 = arith.constant 0 : index
    %24 = vector.load %arg14[%c0_9, %c0_10] : memref<8x16xf32, #tpu.memory_space<vmem>>, vector<8x16xf32>
    %cst_11 = arith.constant dense<0.000000e+00> : vector<8x16xf32>
    %25 = tpu.matmul %23, %24, %cst_11 {dimension_numbers = #tpu.dot_dimension_numbers<[1], [0], [0], [1], [0, 0, 1, 1], [], []>} : vector<8x8xf32>, vector<8x16xf32>, vector<8x16xf32> -> vector<8x16xf32>
    %c0_12 = arith.constant 0 : index
    %c0_13 = arith.constant 0 : index
    %26 = vector.load %arg7[%c0_12, %c0_13] : memref<16x32xf32, #tpu.memory_space<vmem>>, vector<16x32xf32>
    %cst_14 = arith.constant dense<0.000000e+00> : vector<8x32xf32>
    %27 = tpu.matmul %25, %26, %cst_14 {dimension_numbers = #tpu.dot_dimension_numbers<[1], [0], [0], [1], [0, 0, 1, 1], [], []>} : vector<8x16xf32>, vector<16x32xf32>, vector<8x32xf32> -> vector<8x32xf32>
    %c0_15 = arith.constant 0 : index
    %c0_16 = arith.constant 0 : index
    %28 = vector.load %arg8[%c0_15, %c0_16] : memref<1x32xf32, #tpu.memory_space<vmem>>, vector<1x32xf32>
    %29 = vector.broadcast %28 : vector<1x32xf32> to vector<8x32xf32>
    %30 = arith.addf %27, %29 : vector<8x32xf32>
    %c0_17 = arith.constant 0 : index
    %31 = arith.index_cast %1 : i32 to index
    %c0_18 = arith.constant 0 : index
    %32 = vector.load %arg2[%c0_17, %31, %c0_18] : memref<1x8x32xf32, #tpu.memory_space<vmem>>, vector<1x8x32xf32>
    %33 = vector.shape_cast %32 : vector<1x8x32xf32> to vector<8x32xf32>
    %34 = arith.addf %30, %33 : vector<8x32xf32>
    %cst_19 = arith.constant 0.707106769 : f32
    %35 = vector.broadcast %cst_19 : f32 to vector<8x32xf32>
    %36 = arith.mulf %34, %35 : vector<8x32xf32>
    %c0_20 = arith.constant 0 : index
    %c0_21 = arith.constant 0 : index
    %c0_22 = arith.constant 0 : index
    %37 = vector.load %arg4[%c0_20, %c0_21, %c0_22] : memref<1x8x1xf32, #tpu.memory_space<vmem>>, vector<1x8x1xf32>
    %38 = vector.shape_cast %37 : vector<1x8x1xf32> to vector<8x1xf32>
    %39 = vector.broadcast %38 : vector<8x1xf32> to vector<8x32xf32>
    %40 = arith.mulf %36, %39 : vector<8x32xf32>
    %c0_23 = arith.constant 0 : index
    %c0_24 = arith.constant 0 : index
    %c0_25 = arith.constant 0 : index
    %41 = vector.load %arg11[%c0_23, %c0_24, %c0_25] : memref<1x8x32xf32, #tpu.memory_space<vmem>>, vector<1x8x32xf32>
    %42 = vector.shape_cast %41 : vector<1x8x32xf32> to vector<8x32xf32>
    %43 = vector.shape_cast %40 : vector<8x32xf32> to vector<1x8x32xf32>
    tpu.vector_store %arg11[%c0_23, %c0_24, %c0_25], %43 {strides = array<i32>} : memref<1x8x32xf32, #tpu.memory_space<vmem>>, vector<1x8x32xf32>,
    return
  }
  func.func @transform_0(%arg0: i32, %arg1: i32) -> (i32, i32, i32) {
    %c0_i32 = arith.constant 0 : i32
    %c0_i32_0 = arith.constant 0 : i32
    %c0_i32_1 = arith.constant 0 : i32
    return %arg0, %c0_i32, %c0_i32_0 : i32, i32, i32
  }
  func.func @transform_1(%arg0: i32, %arg1: i32) -> (i32, i32, i32) {
    %c0_i32 = arith.constant 0 : i32
    %c0_i32_0 = arith.constant 0 : i32
    return %arg0, %arg1, %c0_i32 : i32, i32, i32
  }
  func.func @transform_2(%arg0: i32, %arg1: i32) -> (i32, i32, i32) {
    %c0_i32 = arith.constant 0 : i32
    %c0_i32_0 = arith.constant 0 : i32
    return %arg0, %arg1, %c0_i32 : i32, i32, i32
  }
  func.func @transform_3(%arg0: i32, %arg1: i32) -> (i32, i32) {
    %c0_i32 = arith.constant 0 : i32
    %c0_i32_0 = arith.constant 0 : i32
    %c0_i32_1 = arith.constant 0 : i32
    return %c0_i32, %c0_i32_0 : i32, i32
  }
  func.func @transform_4(%arg0: i32, %arg1: i32) -> (i32, i32) {
    %c0_i32 = arith.constant 0 : i32
    %c0_i32_0 = arith.constant 0 : i32
    %c0_i32_1 = arith.constant 0 : i32
    return %c0_i32, %c0_i32_0 : i32, i32
  }
  func.func @transform_5(%arg0: i32, %arg1: i32) -> (i32, i32) {
    %c0_i32 = arith.constant 0 : i32
    %c0_i32_0 = arith.constant 0 : i32
    %c0_i32_1 = arith.constant 0 : i32
    return %c0_i32, %c0_i32_0 : i32, i32
  }
  func.func @transform_6(%arg0: i32, %arg1: i32) -> (i32, i32) {
    %c0_i32 = arith.constant 0 : i32
    %c0_i32_0 = arith.constant 0 : i32
    %c0_i32_1 = arith.constant 0 : i32
    return %c0_i32, %c0_i32_0 : i32, i32
  }
  func.func @transform_7(%arg0: i32, %arg1: i32) -> (i32, i32) {
    %c0_i32 = arith.constant 0 : i32
    %c0_i32_0 = arith.constant 0 : i32
    %c0_i32_1 = arith.constant 0 : i32
    return %c0_i32, %c0_i32_0 : i32, i32
  }
  func.func @transform_8(%arg0: i32, %arg1: i32) -> (i32, i32) {
    %c0_i32 = arith.constant 0 : i32
    %c0_i32_0 = arith.constant 0 : i32
    %c0_i32_1 = arith.constant 0 : i32
    return %c0_i32, %c0_i32_0 : i32, i32
  }
  func.func @transform_9(%arg0: i32, %arg1: i32) -> (i32, i32, i32) {
    %c0_i32 = arith.constant 0 : i32
    %c0_i32_0 = arith.constant 0 : i32
    return %arg0, %arg1, %c0_i32 : i32, i32, i32
  }
}

module attributes {stable_mosaic.version = 11 : i64} {
  func.func @_att_sublayer_kernel(%arg0: i32, %arg1: i32, %arg2: memref<1x8x32xf32, #tpu.memory_space<vmem>>, %arg3: memref<1x8x8xf32, #tpu.memory_space<vmem>>, %arg4: memref<1x8x1xf32, #tpu.memory_space<vmem>>, %arg5: memref<32x48xf32, #tpu.memory_space<vmem>>, %arg6: memref<1x48xf32, #tpu.memory_space<vmem>>, %arg7: memref<16x32xf32, #tpu.memory_space<vmem>>, %arg8: memref<1x32xf32, #tpu.memory_space<vmem>>, %arg9: memref<1x32xf32, #tpu.memory_space<vmem>>, %arg10: memref<1x32xf32, #tpu.memory_space<vmem>>, %arg11: memref<1x8x32xf32, #tpu.memory_space<vmem>>, %arg12: memref<8x16xf32, #tpu.memory_space<vmem>>, %arg13: memref<8x16xf32, #tpu.memory_space<vmem>>, %arg14: memref<8x16xf32, #tpu.memory_space<vmem>>) attributes {dimension_semantics = [#tpu.dimension_semantics<parallel>, #tpu.dimension_semantics<arbitrary>], iteration_bounds = array<i64: 2, 1>, scalar_prefetch = 0 : i64, scratch_operands = 3 : i64, tpu.core_type = #tpu.core_type<tc>, window_params = [{transform_indices = @transform_0, window_bounds = array<i64: 1, 8, 32>}, {transform_indices = @transform_1, window_bounds = array<i64: 1, 8, 8>}, {transform_indices = @transform_2, window_bounds = array<i64: 1, 8, 1>}, {pipeline_mode = #tpu.pipeline_mode<synchronous>, transform_indices = @transform_3, window_bounds = array<i64: 32, 48>}, {pipeline_mode = #tpu.pipeline_mode<synchronous>, transform_indices = @transform_4, window_bounds = array<i64: 1, 48>}, {pipeline_mode = #tpu.pipeline_mode<synchronous>, transform_indices = @transform_5, window_bounds = array<i64: 16, 32>}, {pipeline_mode = #tpu.pipeline_mode<synchronous>, transform_indices = @transform_6, window_bounds = array<i64: 1, 32>}, {pipeline_mode = #tpu.pipeline_mode<synchronous>, transform_indices = @transform_7, window_bounds = array<i64: 1, 32>}, {pipeline_mode = #tpu.pipeline_mode<synchronous>, transform_indices = @transform_8, window_bounds = array<i64: 1, 32>}, {transform_indices = @transform_9, window_bounds = array<i64: 1, 8, 32>}]} {
    %c8_i32 = arith.constant 8 : i32
    %0 = arith.muli %arg1, %c8_i32 : i32
    %1 = tpu.assume_multiple %0, 8 : i32
    %c0_i32 = arith.constant 0 : i32
    %2 = arith.cmpi eq, %arg1, %c0_i32 : i32
    %3 = arith.extui %2 : i1 to i32
    %c0_i32_0 = arith.constant 0 : i32
    %4 = arith.cmpi ne, %3, %c0_i32_0 : i32
    scf.if %4 {
      %c0_26 = arith.constant 0 : index
      %c0_27 = arith.constant 0 : index
      %c0_28 = arith.constant 0 : index
      %44 = vector.load %arg2[%c0_26, %c0_27, %c0_28] : memref<1x8x32xf32, #tpu.memory_space<vmem>>, vector<1x8x32xf32>
      %45 = vector.shape_cast %44 : vector<1x8x32xf32> to vector<8x32xf32>
      %cst_29 = arith.constant dense<0.000000e+00> : vector<8xf32>
      %46 = vector.multi_reduction <add>, %45, %cst_29 [1] : vector<8x32xf32> to vector<8xf32>
      %47 = vector.shape_cast %46 : vector<8xf32> to vector<8x1xf32>
      %cst_30 = arith.constant 3.200000e+01 : f32
      %48 = vector.broadcast %cst_30 : f32 to vector<8x1xf32>
      %49 = arith.divf %47, %48 : vector<8x1xf32>
      %50 = vector.broadcast %49 : vector<8x1xf32> to vector<8x32xf32>
      %51 = arith.subf %45, %50 : vector<8x32xf32>
      %52 = arith.mulf %51, %51 : vector<8x32xf32>
      %cst_31 = arith.constant dense<0.000000e+00> : vector<8xf32>
      %53 = vector.multi_reduction <add>, %52, %cst_31 [1] : vector<8x32xf32> to vector<8xf32>
      %54 = vector.shape_cast %53 : vector<8xf32> to vector<8x1xf32>
      %cst_32 = arith.constant 3.200000e+01 : f32
      %55 = vector.broadcast %cst_32 : f32 to vector<8x1xf32>
      %56 = arith.divf %54, %55 : vector<8x1xf32>
      %cst_33 = arith.constant 9.99999974E-6 : f32
      %57 = vector.broadcast %cst_33 : f32 to vector<8x1xf32>
      %58 = arith.addf %56, %57 : vector<8x1xf32>
      %59 = math.rsqrt %58 : vector<8x1xf32>
      %60 = vector.broadcast %59 : vector<8x1xf32> to vector<8x32xf32>
      %61 = arith.mulf %51, %60 : vector<8x32xf32>
      %c0_34 = arith.constant 0 : index
      %c0_35 = arith.constant 0 : index
      %62 = vector.load %arg9[%c0_34, %c0_35] : memref<1x32xf32, #tpu.memory_space<vmem>>, vector<1x32xf32>
      %63 = vector.broadcast %62 : vector<1x32xf32> to vector<8x32xf32>
      %64 = arith.mulf %61, %63 : vector<8x32xf32>
      %c0_36 = arith.constant 0 : index
      %c0_37 = arith.constant 0 : index
      %65 = vector.load %arg10[%c0_36, %c0_37] : memref<1x32xf32, #tpu.memory_space<vmem>>, vector<1x32xf32>
      %66 = vector.broadcast %65 : vector<1x32xf32> to vector<8x32xf32>
      %67 = arith.addf %64, %66 : vector<8x32xf32>
      %c0_38 = arith.constant 0 : index
      %c0_39 = arith.constant 0 : index
      %68 = vector.load %arg5[%c0_38, %c0_39] : memref<32x48xf32, #tpu.memory_space<vmem>>, vector<32x48xf32>
      %cst_40 = arith.constant dense<0.000000e+00> : vector<8x48xf32>
      %69 = tpu.matmul %67, %68, %cst_40 {dimension_numbers = #tpu.dot_dimension_numbers<[1], [0], [0], [1], [0, 0, 1, 1], [], []>} : vector<8x32xf32>, vector<32x48xf32>, vector<8x48xf32> -> vector<8x48xf32>
      %c0_41 = arith.constant 0 : index
      %c0_42 = arith.constant 0 : index
      %70 = vector.load %arg6[%c0_41, %c0_42] : memref<1x48xf32, #tpu.memory_space<vmem>>, vector<1x48xf32>
      %71 = vector.broadcast %70 : vector<1x48xf32> to vector<8x48xf32>
      %72 = arith.addf %69, %71 : vector<8x48xf32>
      %73 = vector.extract_strided_slice %72 {offsets = [0, 0], sizes = [8, 16], strides = [1, 1]} : vector<8x48xf32> to vector<8x16xf32>
      %c0_43 = arith.constant 0 : index
      %c0_44 = arith.constant 0 : index
      %74 = vector.load %arg12[%c0_43, %c0_44] : memref<8x16xf32, #tpu.memory_space<vmem>>, vector<8x16xf32>
      tpu.vector_store %arg12[%c0_43, %c0_44], %73 {strides = array<i32>} : memref<8x16xf32, #tpu.memory_space<vmem>>, vector<8x16xf32>,
      %75 = vector.extract_strided_slice %72 {offsets = [0, 16], sizes = [8, 16], strides = [1, 1]} : vector<8x48xf32> to vector<8x16xf32>
      %c0_45 = arith.constant 0 : index
      %c0_46 = arith.constant 0 : index
      %76 = vector.load %arg13[%c0_45, %c0_46] : memref<8x16xf32, #tpu.memory_space<vmem>>, vector<8x16xf32>
      tpu.vector_store %arg13[%c0_45, %c0_46], %75 {strides = array<i32>} : memref<8x16xf32, #tpu.memory_space<vmem>>, vector<8x16xf32>,
      %77 = vector.extract_strided_slice %72 {offsets = [0, 32], sizes = [8, 16], strides = [1, 1]} : vector<8x48xf32> to vector<8x16xf32>
      %c0_47 = arith.constant 0 : index
      %c0_48 = arith.constant 0 : index
      %78 = vector.load %arg14[%c0_47, %c0_48] : memref<8x16xf32, #tpu.memory_space<vmem>>, vector<8x16xf32>
      tpu.vector_store %arg14[%c0_47, %c0_48], %77 {strides = array<i32>} : memref<8x16xf32, #tpu.memory_space<vmem>>, vector<8x16xf32>,
    } else {
    }
    %5 = arith.index_cast %1 : i32 to index
    %c0 = arith.constant 0 : index
    %6 = vector.load %arg12[%5, %c0] : memref<8x16xf32, #tpu.memory_space<vmem>>, vector<8x16xf32>
    %c0_1 = arith.constant 0 : index
    %c0_2 = arith.constant 0 : index
    %7 = vector.load %arg13[%c0_1, %c0_2] : memref<8x16xf32, #tpu.memory_space<vmem>>, vector<8x16xf32>
    %cst = arith.constant dense<0.000000e+00> : vector<8x8xf32>
    %8 = tpu.matmul %6, %7, %cst {dimension_numbers = #tpu.dot_dimension_numbers<[1], [1], [0], [0], [0, 0, 1, 0], [], []>} : vector<8x16xf32>, vector<8x16xf32>, vector<8x8xf32> -> vector<8x8xf32>
    %c0_3 = arith.constant 0 : index
    %c0_4 = arith.constant 0 : index
    %c0_5 = arith.constant 0 : index
    %9 = vector.load %arg3[%c0_3, %c0_4, %c0_5] : memref<1x8x8xf32, #tpu.memory_space<vmem>>, vector<1x8x8xf32>
    %10 = vector.shape_cast %9 : vector<1x8x8xf32> to vector<8x8xf32>
    %cst_6 = arith.constant 5.55555569E-4 : f32
    %11 = vector.broadcast %cst_6 : f32 to vector<8x8xf32>
    %12 = arith.mulf %10, %11 : vector<8x8xf32>
    %13 = arith.addf %8, %12 : vector<8x8xf32>
    %cst_7 = arith.constant dense<0xFF800000> : vector<8xf32>
    %14 = vector.multi_reduction <maximumf>, %13, %cst_7 [1] : vector<8x8xf32> to vector<8xf32>
    %15 = vector.shape_cast %14 : vector<8xf32> to vector<8x1xf32>
    %16 = vector.broadcast %15 : vector<8x1xf32> to vector<8x8xf32>
    %17 = arith.subf %13, %16 : vector<8x8xf32>
    %18 = math.exp %17 : vector<8x8xf32>
    %cst_8 = arith.constant dense<0.000000e+00> : vector<8xf32>
    %19 = vector.multi_reduction <add>, %18, %cst_8 [1] : vector<8x8xf32> to vector<8xf32>
    %20 = vector.shape_cast %19 : vector<8xf32> to vector<8x1xf32>
    %21 = tpu.reciprocal %20 {approx = true} : vector<8x1xf32> -> vector<8x1xf32>
    %22 = vector.broadcast %21 : vector<8x1xf32> to vector<8x8xf32>
    %23 = arith.mulf %18, %22 : vector<8x8xf32>
    %c0_9 = arith.constant 0 : index
    %c0_10 = arith.constant 0 : index
    %24 = vector.load %arg14[%c0_9, %c0_10] : memref<8x16xf32, #tpu.memory_space<vmem>>, vector<8x16xf32>
    %cst_11 = arith.constant dense<0.000000e+00> : vector<8x16xf32>
    %25 = tpu.matmul %23, %24, %cst_11 {dimension_numbers = #tpu.dot_dimension_numbers<[1], [0], [0], [1], [0, 0, 1, 1], [], []>} : vector<8x8xf32>, vector<8x16xf32>, vector<8x16xf32> -> vector<8x16xf32>
    %c0_12 = arith.constant 0 : index
    %c0_13 = arith.constant 0 : index
    %26 = vector.load %arg7[%c0_12, %c0_13] : memref<16x32xf32, #tpu.memory_space<vmem>>, vector<16x32xf32>
    %cst_14 = arith.constant dense<0.000000e+00> : vector<8x32xf32>
    %27 = tpu.matmul %25, %26, %cst_14 {dimension_numbers = #tpu.dot_dimension_numbers<[1], [0], [0], [1], [0, 0, 1, 1], [], []>} : vector<8x16xf32>, vector<16x32xf32>, vector<8x32xf32> -> vector<8x32xf32>
    %c0_15 = arith.constant 0 : index
    %c0_16 = arith.constant 0 : index
    %28 = vector.load %arg8[%c0_15, %c0_16] : memref<1x32xf32, #tpu.memory_space<vmem>>, vector<1x32xf32>
    %29 = vector.broadcast %28 : vector<1x32xf32> to vector<8x32xf32>
    %30 = arith.addf %27, %29 : vector<8x32xf32>
    %c0_17 = arith.constant 0 : index
    %31 = arith.index_cast %1 : i32 to index
    %c0_18 = arith.constant 0 : index
    %32 = vector.load %arg2[%c0_17, %31, %c0_18] : memref<1x8x32xf32, #tpu.memory_space<vmem>>, vector<1x8x32xf32>
    %33 = vector.shape_cast %32 : vector<1x8x32xf32> to vector<8x32xf32>
    %34 = arith.addf %30, %33 : vector<8x32xf32>
    %cst_19 = arith.constant 0.707106769 : f32
    %35 = vector.broadcast %cst_19 : f32 to vector<8x32xf32>
    %36 = arith.mulf %34, %35 : vector<8x32xf32>
    %c0_20 = arith.constant 0 : index
    %c0_21 = arith.constant 0 : index
    %c0_22 = arith.constant 0 : index
    %37 = vector.load %arg4[%c0_20, %c0_21, %c0_22] : memref<1x8x1xf32, #tpu.memory_space<vmem>>, vector<1x8x1xf32>
    %38 = vector.shape_cast %37 : vector<1x8x1xf32> to vector<8x1xf32>
    %39 = vector.broadcast %38 : vector<8x1xf32> to vector<8x32xf32>
    %40 = arith.mulf %36, %39 : vector<8x32xf32>
    %c0_23 = arith.constant 0 : index
    %c0_24 = arith.constant 0 : index
    %c0_25 = arith.constant 0 : index
    %41 = vector.load %arg11[%c0_23, %c0_24, %c0_25] : memref<1x8x32xf32, #tpu.memory_space<vmem>>, vector<1x8x32xf32>
    %42 = vector.shape_cast %41 : vector<1x8x32xf32> to vector<8x32xf32>
    %43 = vector.shape_cast %40 : vector<8x32xf32> to vector<1x8x32xf32>
    tpu.vector_store %arg11[%c0_23, %c0_24, %c0_25], %43 {strides = array<i32>} : memref<1x8x32xf32, #tpu.memory_space<vmem>>, vector<1x8x32xf32>,
    return
  }
  func.func @transform_0(%arg0: i32, %arg1: i32) -> (i32, i32, i32) {
    %c0_i32 = arith.constant 0 : i32
    %c0_i32_0 = arith.constant 0 : i32
    %c0_i32_1 = arith.constant 0 : i32
    return %arg0, %c0_i32, %c0_i32_0 : i32, i32, i32
  }
  func.func @transform_1(%arg0: i32, %arg1: i32) -> (i32, i32, i32) {
    %c0_i32 = arith.constant 0 : i32
    %c0_i32_0 = arith.constant 0 : i32
    return %arg0, %arg1, %c0_i32 : i32, i32, i32
  }
  func.func @transform_2(%arg0: i32, %arg1: i32) -> (i32, i32, i32) {
    %c0_i32 = arith.constant 0 : i32
    %c0_i32_0 = arith.constant 0 : i32
    return %arg0, %arg1, %c0_i32 : i32, i32, i32
  }
  func.func @transform_3(%arg0: i32, %arg1: i32) -> (i32, i32) {
    %c0_i32 = arith.constant 0 : i32
    %c0_i32_0 = arith.constant 0 : i32
    %c0_i32_1 = arith.constant 0 : i32
    return %c0_i32, %c0_i32_0 : i32, i32
  }
  func.func @transform_4(%arg0: i32, %arg1: i32) -> (i32, i32) {
    %c0_i32 = arith.constant 0 : i32
    %c0_i32_0 = arith.constant 0 : i32
    %c0_i32_1 = arith.constant 0 : i32
    return %c0_i32, %c0_i32_0 : i32, i32
  }
  func.func @transform_5(%arg0: i32, %arg1: i32) -> (i32, i32) {
    %c0_i32 = arith.constant 0 : i32
    %c0_i32_0 = arith.constant 0 : i32
    %c0_i32_1 = arith.constant 0 : i32
    return %c0_i32, %c0_i32_0 : i32, i32
  }
  func.func @transform_6(%arg0: i32, %arg1: i32) -> (i32, i32) {
    %c0_i32 = arith.constant 0 : i32
    %c0_i32_0 = arith.constant 0 : i32
    %c0_i32_1 = arith.constant 0 : i32
    return %c0_i32, %c0_i32_0 : i32, i32
  }
  func.func @transform_7(%arg0: i32, %arg1: i32) -> (i32, i32) {
    %c0_i32 = arith.constant 0 : i32
    %c0_i32_0 = arith.constant 0 : i32
    %c0_i32_1 = arith.constant 0 : i32
    return %c0_i32, %c0_i32_0 : i32, i32
  }
  func.func @transform_8(%arg0: i32, %arg1: i32) -> (i32, i32) {
    %c0_i32 = arith.constant 0 : i32
    %c0_i32_0 = arith.constant 0 : i32
    %c0_i32_1 = arith.constant 0 : i32
    return %c0_i32, %c0_i32_0 : i32, i32
  }
  func.func @transform_9(%arg0: i32, %arg1: i32) -> (i32, i32, i32) {
    %c0_i32 = arith.constant 0 : i32
    %c0_i32_0 = arith.constant 0 : i32
    return %arg0, %arg1, %c0_i32 : i32, i32, i32
  }
}

</mosaic_0001>

<llo_original>
// kernel: tpu_custom_call.1
$region0: #{tpu_custom_call.1}
  #allocation0 [shape = 'u32[]', space=smem, size = 0x4, offset = 0x4, fixed_abs, tag = 'smem constant byte address 0x4 - core index']
  #allocation1 [shape = 'u32[144,128]{1,0:T(1,128)}', space=vmem, size = 0x12000, scoped, tag = 'internal scratch']
  #allocation2 [shape = 'f32[8,16]{1,0:T(8,128)}', space=vmem, size = 0x1000, scoped, tag = 'scratch operand']
  #allocation3 [shape = 'f32[8,16]{1,0:T(8,128)}', space=vmem, size = 0x1000, scoped, tag = 'scratch operand']
  #allocation4 [shape = 'f32[8,16]{1,0:T(8,128)}', space=vmem, size = 0x1000, scoped, tag = 'scratch operand']
  %s0 = inlined_call_operand.vmem [shape: f32[2,8,32], index: 0, kind: input, shape index: {}]
  %s1 = inlined_call_operand.hbm [shape: f32[2,8,8], index: 1, kind: input, shape index: {}]
  %s2 = inlined_call_operand.vmem [shape: f32[2,8,1], index: 2, kind: input, shape index: {}]
  %s3 = inlined_call_operand.hbm [shape: f32[32,48], index: 3, kind: input, shape index: {}]
  %s4 = inlined_call_operand.vmem [shape: f32[1,48], index: 4, kind: input, shape index: {}]
  %s5 = inlined_call_operand.hbm [shape: f32[16,32], index: 5, kind: input, shape index: {}]
  %s6 = inlined_call_operand.vmem [shape: f32[1,32], index: 6, kind: input, shape index: {}]
  %s7 = inlined_call_operand.vmem [shape: f32[1,32], index: 7, kind: input, shape index: {}]
  %s8 = inlined_call_operand.vmem [shape: f32[1,32], index: 8, kind: input, shape index: {}]
  %s9 = inlined_call_operand.hbm [shape: f32[2,8,32], index: 9, kind: output, shape index: {}]
  %s10 = sld [smem:[#allocation0]]
  $region85: #{tpu_custom_call.1} parent=0
    _
  %s12 = ssub.s32 1, %s10
  %s13 = scalar_select 0, %s12, %s10
  $region1: #{tpu_custom_call.1} parent=0
    #allocation5 [shape = 'u8[8192]{0}', space=vmem, size = 0x2000, scoped, tag = 'input window, operand 1']
    #allocation6 [shape = 's32[2]{0}', space=sflag, size = 0x8, scoped, tag = 'scoped memory for tpu_custom_call.1']
    #allocation7 [shape = 's32[2]{0}', space=sflag, size = 0x8, scoped, tag = 'scoped memory for tpu_custom_call.1']
    #allocation8 [shape = 'u8[16384]{0}', space=vmem, size = 0x4000, scoped, tag = 'input window, operand 3, single buffered']
    #allocation9 [shape = 's32[1]{0}', space=sflag, size = 0x4, scoped, tag = 'scoped memory for tpu_custom_call.1']
    #allocation10 [shape = 'u8[8192]{0}', space=vmem, size = 0x2000, scoped, tag = 'input window, operand 5, single buffered']
    #allocation11 [shape = 'u8[8192]{0}', space=vmem, size = 0x2000, scoped, tag = 'output window, operand 0']
    %14 = vsyncpa [#allocation6], 0
    %s15 = scalar_lea.sflag [#allocation6], 1
    %16 = vsyncpa %s15, 0
    %17 = vsyncpa [#allocation9], 0
    %18 = vsyncpa [#allocation7], 0
    %s19 = scalar_lea.sflag [#allocation7], 1
    %20 = vsyncpa %s19, 0
    loop: start=0, step=1, limit=4
    $region2: #{tpu_custom_call.1} parent=1 // loop_pre_header
      _
    $region3: #{tpu_custom_call.1} parent=1 // loop_header
      %s22 = sphi 0, %s26
      %p23 = scmp.ge.s32.totalorder %s22, 4
      %s29 = sphi 0, %s41
      %s30 = sphi 0, %s37
      %s31 = sphi 0, %s29
      %s32 = sphi 0, %s30
      %s33 = sphi 0, %s31
      %s34 = sphi 0, %s32
      %s44 = sphi 0, %s46
      %s47 = sphi 0, %s44
      %s48 = sphi 0, %s47
      %s64 = sphi 0, %s48
      %s72 = sphi 0, %s74
      %s75 = sphi 0, %s72
      %s76 = sphi 0, %s75
      %s92 = sphi 0, %s76
      %s100 = sphi 0, %s102
      %s103 = sphi 0, %s100
      %s104 = sphi 0, %s103
      %s120 = sphi 0, %s104
      %s124 = sphi 0, %s124
      %s126 = sphi 0, %s124
      %s127 = sphi 0, %s126
      %s141 = sphi 0, %s127
      %s145 = sphi 0, %s145
      %s147 = sphi 0, %s145
      %s148 = sphi 0, %s147
      %s162 = sphi 0, %s148
      %s166 = sphi 0, %s166
      %s168 = sphi 0, %s166
      %s169 = sphi 0, %s168
      %s183 = sphi 0, %s169
      %s187 = sphi 0, %s187
      %s189 = sphi 0, %s187
      %s190 = sphi 0, %s189
      %s204 = sphi 0, %s190
      %s208 = sphi 0, %s208
      %s210 = sphi 0, %s208
      %s211 = sphi 0, %s210
      %s225 = sphi 0, %s211
      %s229 = sphi 0, %s229
      %s231 = sphi 0, %s229
      %s232 = sphi 0, %s231
      %s246 = sphi 0, %s232
      %s254 = sphi 0, %s256
      %s257 = sphi 0, %s254
      %s258 = sphi 0, %s257
      %s274 = sphi 0, %s258
    $region4: #{tpu_custom_call.1} parent=1 // loop_header_branch
      %25 = sbr.rel (%p23) target = $region8
    $region5: #{tpu_custom_call.1} parent=1 // loop_body
      %s27 = ssub.s32 %s22, 1
      %s28 = ssub.s32 %s22, 2
      %s35 = sadd.s32 1, %s30
      %p36 = scmp.ge.s32.totalorder %s35, 1
      %s37 = scalar_select %p36, 0, %s35
      %s38 = sadd.s32 1, %s29
      %s39 = scalar_select %p36, %s38, %s29
      %p40 = scmp.ge.s32.totalorder %s39, 2
      %s41 = scalar_select %p40, 0, %s39
      %s42 = ssub.s32 %s29, %s41
      %p43 = scmp.eq.s32.totalorder %s42, 0
      %s45 = sadd.s32 %s44, 1
      %s46 = scalar_select %p43, %s44, %s45
      %p49 = pneg %p43
      %p50 = scmp.eq.s32.totalorder %s22, 1
      %p51 = por %p49, %p50
      %p52 = scmp.ne.s32.totalorder %s44, %s47
      %p53 = scmp.eq.s32.totalorder %s22, 0
      %p54 = por %p52, %p53
      %p55 = scmp.ne.s32.totalorder %s44, %s47
      %p56 = scmp.eq.s32.totalorder %s27, 1
      %p57 = por %p55, %p56
      %p58 = scmp.ne.s32.totalorder %s47, %s48
      %p59 = scmp.eq.s32.totalorder %s27, 0
      %p60 = por %p58, %p59
      %p61 = scmp.ne.s32.totalorder %s47, %s48
      %p62 = scmp.eq.s32.totalorder %s28, 1
      %p63 = por %p61, %p62
      %p65 = scmp.ne.s32.totalorder %s48, %s64
      %p66 = scmp.eq.s32.totalorder %s28, 0
      %p67 = por %p65, %p66
      %s68 = ssub.s32 %s29, %s41
      %s69 = ssub.s32 %s30, %s37
      %s70 = sor.u32 %s68, %s69
      %p71 = scmp.eq.s32.totalorder %s70, 0
      %s73 = sadd.s32 %s72, 1
      %s74 = scalar_select %p71, %s72, %s73
      %p77 = pneg %p71
      %p78 = scmp.eq.s32.totalorder %s22, 1
      %p79 = por %p77, %p78
      %p80 = scmp.ne.s32.totalorder %s72, %s75
      %p81 = scmp.eq.s32.totalorder %s22, 0
      %p82 = por %p80, %p81
      %p83 = scmp.ne.s32.totalorder %s72, %s75
      %p84 = scmp.eq.s32.totalorder %s27, 1
      %p85 = por %p83, %p84
      %p86 = scmp.ne.s32.totalorder %s75, %s76
      %p87 = scmp.eq.s32.totalorder %s27, 0
      %p88 = por %p86, %p87
      %p89 = scmp.ne.s32.totalorder %s75, %s76
      %p90 = scmp.eq.s32.totalorder %s28, 1
      %p91 = por %p89, %p90
      %p93 = scmp.ne.s32.totalorder %s76, %s92
      %p94 = scmp.eq.s32.totalorder %s28, 0
      %p95 = por %p93, %p94
      %s96 = ssub.s32 %s29, %s41
      %s97 = ssub.s32 %s30, %s37
      %s98 = sor.u32 %s96, %s97
      %p99 = scmp.eq.s32.totalorder %s98, 0
      %s101 = sadd.s32 %s100, 1
      %s102 = scalar_select %p99, %s100, %s101
      %p105 = pneg %p99
      %p106 = scmp.eq.s32.totalorder %s22, 1
      %p107 = por %p105, %p106
      %p108 = scmp.ne.s32.totalorder %s100, %s103
      %p109 = scmp.eq.s32.totalorder %s22, 0
      %p110 = por %p108, %p109
      %p111 = scmp.ne.s32.totalorder %s100, %s103
      %p112 = scmp.eq.s32.totalorder %s27, 1
      %p113 = por %p111, %p112
      %p114 = scmp.ne.s32.totalorder %s103, %s104
      %p115 = scmp.eq.s32.totalorder %s27, 0
      %p116 = por %p114, %p115
      %p117 = scmp.ne.s32.totalorder %s103, %s104
      %p118 = scmp.eq.s32.totalorder %s28, 1
      %p119 = por %p117, %p118
      %p121 = scmp.ne.s32.totalorder %s104, %s120
      %p122 = scmp.eq.s32.totalorder %s28, 0
      %p123 = por %p121, %p122
      %s125 = sadd.s32 %s124, 1
      %p128 = scmp.eq.s32.totalorder %s22, 1
      %p129 = scmp.ne.s32.totalorder %s124, %s126
      %p130 = scmp.eq.s32.totalorder %s22, 0
      %p131 = por %p129, %p130
      %p132 = scmp.ne.s32.totalorder %s124, %s126
      %p133 = scmp.eq.s32.totalorder %s27, 1
      %p134 = por %p132, %p133
      %p135 = scmp.ne.s32.totalorder %s126, %s127
      %p136 = scmp.eq.s32.totalorder %s27, 0
      %p137 = por %p135, %p136
      %p138 = scmp.ne.s32.totalorder %s126, %s127
      %p139 = scmp.eq.s32.totalorder %s28, 1
      %p140 = por %p138, %p139
      %p142 = scmp.ne.s32.totalorder %s127, %s141
      %p143 = scmp.eq.s32.totalorder %s28, 0
      %p144 = por %p142, %p143
      %s146 = sadd.s32 %s145, 1
      %p149 = scmp.eq.s32.totalorder %s22, 1
      %p150 = scmp.ne.s32.totalorder %s145, %s147
      %p151 = scmp.eq.s32.totalorder %s22, 0
      %p152 = por %p150, %p151
      %p153 = scmp.ne.s32.totalorder %s145, %s147
      %p154 = scmp.eq.s32.totalorder %s27, 1
      %p155 = por %p153, %p154
      %p156 = scmp.ne.s32.totalorder %s147, %s148
      %p157 = scmp.eq.s32.totalorder %s27, 0
      %p158 = por %p156, %p157
      %p159 = scmp.ne.s32.totalorder %s147, %s148
      %p160 = scmp.eq.s32.totalorder %s28, 1
      %p161 = por %p159, %p160
      %p163 = scmp.ne.s32.totalorder %s148, %s162
      %p164 = scmp.eq.s32.totalorder %s28, 0
      %p165 = por %p163, %p164
      %s167 = sadd.s32 %s166, 1
      %p170 = scmp.eq.s32.totalorder %s22, 1
      %p171 = scmp.ne.s32.totalorder %s166, %s168
      %p172 = scmp.eq.s32.totalorder %s22, 0
      %p173 = por %p171, %p172
      %p174 = scmp.ne.s32.totalorder %s166, %s168
      %p175 = scmp.eq.s32.totalorder %s27, 1
      %p176 = por %p174, %p175
      %p177 = scmp.ne.s32.totalorder %s168, %s169
      %p178 = scmp.eq.s32.totalorder %s27, 0
      %p179 = por %p177, %p178
      %p180 = scmp.ne.s32.totalorder %s168, %s169
      %p181 = scmp.eq.s32.totalorder %s28, 1
      %p182 = por %p180, %p181
      %p184 = scmp.ne.s32.totalorder %s169, %s183
      %p185 = scmp.eq.s32.totalorder %s28, 0
      %p186 = por %p184, %p185
      %s188 = sadd.s32 %s187, 1
      %p191 = scmp.eq.s32.totalorder %s22, 1
      %p192 = scmp.ne.s32.totalorder %s187, %s189
      %p193 = scmp.eq.s32.totalorder %s22, 0
      %p194 = por %p192, %p193
      %p195 = scmp.ne.s32.totalorder %s187, %s189
      %p196 = scmp.eq.s32.totalorder %s27, 1
      %p197 = por %p195, %p196
      %p198 = scmp.ne.s32.totalorder %s189, %s190
      %p199 = scmp.eq.s32.totalorder %s27, 0
      %p200 = por %p198, %p199
      %p201 = scmp.ne.s32.totalorder %s189, %s190
      %p202 = scmp.eq.s32.totalorder %s28, 1
      %p203 = por %p201, %p202
      %p205 = scmp.ne.s32.totalorder %s190, %s204
      %p206 = scmp.eq.s32.totalorder %s28, 0
      %p207 = por %p205, %p206
      %s209 = sadd.s32 %s208, 1
      %p212 = scmp.eq.s32.totalorder %s22, 1
      %p213 = scmp.ne.s32.totalorder %s208, %s210
      %p214 = scmp.eq.s32.totalorder %s22, 0
      %p215 = por %p213, %p214
      %p216 = scmp.ne.s32.totalorder %s208, %s210
      %p217 = scmp.eq.s32.totalorder %s27, 1
      %p218 = por %p216, %p217
      %p219 = scmp.ne.s32.totalorder %s210, %s211
      %p220 = scmp.eq.s32.totalorder %s27, 0
      %p221 = por %p219, %p220
      %p222 = scmp.ne.s32.totalorder %s210, %s211
      %p223 = scmp.eq.s32.totalorder %s28, 1
      %p224 = por %p222, %p223
      %p226 = scmp.ne.s32.totalorder %s211, %s225
      %p227 = scmp.eq.s32.totalorder %s28, 0
      %p228 = por %p226, %p227
      %s230 = sadd.s32 %s229, 1
      %p233 = scmp.eq.s32.totalorder %s22, 1
      %p234 = scmp.ne.s32.totalorder %s229, %s231
      %p235 = scmp.eq.s32.totalorder %s22, 0
      %p236 = por %p234, %p235
      %p237 = scmp.ne.s32.totalorder %s229, %s231
      %p238 = scmp.eq.s32.totalorder %s27, 1
      %p239 = por %p237, %p238
      %p240 = scmp.ne.s32.totalorder %s231, %s232
      %p241 = scmp.eq.s32.totalorder %s27, 0
      %p242 = por %p240, %p241
      %p243 = scmp.ne.s32.totalorder %s231, %s232
      %p244 = scmp.eq.s32.totalorder %s28, 1
      %p245 = por %p243, %p244
      %p247 = scmp.ne.s32.totalorder %s232, %s246
      %p248 = scmp.eq.s32.totalorder %s28, 0
      %p249 = por %p247, %p248
      %s250 = ssub.s32 %s29, %s41
      %s251 = ssub.s32 %s30, %s37
      %s252 = sor.u32 %s250, %s251
      %p253 = scmp.eq.s32.totalorder %s252, 0
      %s255 = sadd.s32 %s254, 1
      %s256 = scalar_select %p253, %s254, %s255
      %p259 = pneg %p253
      %p260 = scmp.eq.s32.totalorder %s22, 1
      %p261 = por %p259, %p260
      %p262 = scmp.ne.s32.totalorder %s254, %s257
      %p263 = scmp.eq.s32.totalorder %s22, 0
      %p264 = por %p262, %p263
      %p265 = scmp.ne.s32.totalorder %s254, %s257
      %p266 = scmp.eq.s32.totalorder %s27, 1
      %p267 = por %p265, %p266
      %p268 = scmp.ne.s32.totalorder %s257, %s258
      %p269 = scmp.eq.s32.totalorder %s27, 0
      %p270 = por %p268, %p269
      %p271 = scmp.ne.s32.totalorder %s257, %s258
      %p272 = scmp.eq.s32.totalorder %s28, 1
      %p273 = por %p271, %p272
      %p275 = scmp.ne.s32.totalorder %s258, %s274
      %p276 = scmp.eq.s32.totalorder %s28, 0
      %p277 = por %p275, %p276
      %p278 = scmp.le.s32.totalorder 1, %s22
      %p279 = scmp.lt.s32.totalorder %s22, 3
      %p280 = pnand %p278, %p279
      %p281 = pneg %p280
      // Predicated region
      $region9: #{tpu_custom_call.1} parent=5 // pred_check
        _
      $region10: #{tpu_custom_call.1} parent=5 // pred_check_branch
        %283 = sbr.rel (%p280) target = $region12
      $region11: #{tpu_custom_call.1} parent=5 // pred_region
        %s284 = ssub.s32 %s22, 1
        // Predicated region
        $region13: #{tpu_custom_call.1} parent=11 // pred_check
          %p285 = pneg %p137
        $region14: #{tpu_custom_call.1} parent=11 // pred_check_branch
          %287 = sbr.rel (%p285) target = $region16
        $region15: #{tpu_custom_call.1} parent=11 // pred_region
          %s289 = ssub.s32 512, 512
          %290 = vsyncadd [#allocation9], %s289
          %s291 = sshll.u32 [#allocation8], 4
          %s292 = int_to_ptr.vmem [resolvable:$true] %s291
          %297 = dma.hbm_to_vmem [thread:$0]  %s3, 512, %s292, [#allocation9], 128, 128, 8
        $region16: #{tpu_custom_call.1} parent=11 // pred_fallthru
          _
        // Predicated region
        $region17: #{tpu_custom_call.1} parent=11 // pred_check
          %p298 = pneg %p158
        $region18: #{tpu_custom_call.1} parent=11 // pred_check_branch
          %300 = sbr.rel (%p298) target = $region20
        $region19: #{tpu_custom_call.1} parent=11 // pred_region
          _
        $region20: #{tpu_custom_call.1} parent=11 // pred_fallthru
          _
        // Predicated region
        $region21: #{tpu_custom_call.1} parent=11 // pred_check
          %p301 = pneg %p179
        $region22: #{tpu_custom_call.1} parent=11 // pred_check_branch
          %303 = sbr.rel (%p301) target = $region24
        $region23: #{tpu_custom_call.1} parent=11 // pred_region
          %s305 = ssub.s32 256, 256
          %306 = vsyncadd [#allocation9], %s305
          %s307 = sshll.u32 [#allocation10], 4
          %s308 = int_to_ptr.vmem [resolvable:$true] %s307
          %313 = dma.hbm_to_vmem [thread:$0]  %s5, 256, %s308, [#allocation9], 128, 128, 8
        $region24: #{tpu_custom_call.1} parent=11 // pred_fallthru
          _
        // Predicated region
        $region25: #{tpu_custom_call.1} parent=11 // pred_check
          %p314 = pneg %p200
        $region26: #{tpu_custom_call.1} parent=11 // pred_check_branch
          %316 = sbr.rel (%p314) target = $region28
        $region27: #{tpu_custom_call.1} parent=11 // pred_region
          _
        $region28: #{tpu_custom_call.1} parent=11 // pred_fallthru
          _
        // Predicated region
        $region29: #{tpu_custom_call.1} parent=11 // pred_check
          %p317 = pneg %p221
        $region30: #{tpu_custom_call.1} parent=11 // pred_check_branch
          %319 = sbr.rel (%p317) target = $region32
        $region31: #{tpu_custom_call.1} parent=11 // pred_region
          _
        $region32: #{tpu_custom_call.1} parent=11 // pred_fallthru
          _
        // Predicated region
        $region33: #{tpu_custom_call.1} parent=11 // pred_check
          %p320 = pneg %p242
        $region34: #{tpu_custom_call.1} parent=11 // pred_check_branch
          %322 = sbr.rel (%p320) target = $region36
        $region35: #{tpu_custom_call.1} parent=11 // pred_region
          _
        $region36: #{tpu_custom_call.1} parent=11 // pred_fallthru
          _
      $region12: #{tpu_custom_call.1} parent=5 // pred_fallthru
        _
      %p323 = scmp.lt.s32.totalorder %s22, 2
      // Predicated region
      $region37: #{tpu_custom_call.1} parent=5 // pred_check
        %p324 = pneg %p323
      $region38: #{tpu_custom_call.1} parent=5 // pred_check_branch
        %326 = sbr.rel (%p324) target = $region40
      $region39: #{tpu_custom_call.1} parent=5 // pred_region
        // Predicated region
        $region41: #{tpu_custom_call.1} parent=39 // pred_check
          %p327 = pneg %p54
        $region42: #{tpu_custom_call.1} parent=39 // pred_check_branch
          %329 = sbr.rel (%p327) target = $region44
        $region43: #{tpu_custom_call.1} parent=39 // pred_region
          %p330 = scmp.lt.s32.totalorder %s29, 1
          %s331 = scalar_select %p330, %s29, 1
          %s332 = smul.addr %s331, 8
          %s333 = scalar_lea.vmem %s0, %s332
        $region44: #{tpu_custom_call.1} parent=39 // pred_fallthru
          _
        // Predicated region
        $region45: #{tpu_custom_call.1} parent=39 // pred_check
          %p334 = pneg %p82
        $region46: #{tpu_custom_call.1} parent=39 // pred_check_branch
          %336 = sbr.rel (%p334) target = $region48
        $region47: #{tpu_custom_call.1} parent=39 // pred_region
          %s337 = sand.u32 %s72, 1
          %s338 = scalar_lea.sflag [#allocation6], %s337
          %s339 = sand.u32 %s72, 1
          %s340 = smul.addr %s339, 8
          %s341 = scalar_lea.vmem [#allocation5], %s340
          %s343 = ssub.s32 128, 128
          %344 = vsyncadd %s338, %s343
          %s345 = sadd.s32 %s30, %s29
          %s346 = smul.addr %s345, 128
          %s347 = scalar_lea.hbm %s1, %s346
          %s349 = sshll.u32 %s341, 4
          %s350 = int_to_ptr.vmem [resolvable:$true] %s349
          %352 = dma.hbm_to_vmem [thread:$0]  %s347, 128, %s350, %s338
        $region48: #{tpu_custom_call.1} parent=39 // pred_fallthru
          _
        // Predicated region
        $region49: #{tpu_custom_call.1} parent=39 // pred_check
          %p353 = pneg %p110
        $region50: #{tpu_custom_call.1} parent=39 // pred_check_branch
          %355 = sbr.rel (%p353) target = $region52
        $region51: #{tpu_custom_call.1} parent=39 // pred_region
          %p356 = scmp.lt.s32.totalorder %s29, 1
          %s357 = scalar_select %p356, %s29, 1
          %p358 = scmp.lt.s32.totalorder %s30, 0
          %s359 = scalar_select %p358, %s30, 0
          %s360 = sadd.s32 %s359, %s357
          %s361 = smul.addr %s360, 8
          %s362 = scalar_lea.vmem %s2, %s361
        $region52: #{tpu_custom_call.1} parent=39 // pred_fallthru
          _
      $region40: #{tpu_custom_call.1} parent=5 // pred_fallthru
        _
      %p363 = scmp.le.s32.totalorder 1, %s22
      %p364 = scmp.lt.s32.totalorder %s22, 3
      %p365 = pnand %p363, %p364
      %p366 = pneg %p365
      // Predicated region
      $region53: #{tpu_custom_call.1} parent=5 // pred_check
        _
      $region54: #{tpu_custom_call.1} parent=5 // pred_check_branch
        %368 = sbr.rel (%p365) target = $region56
      $region55: #{tpu_custom_call.1} parent=5 // pred_region
        %s369 = ssub.s32 %s22, 1
        %s370 = sand.u32 %s75, 1
        %s371 = scalar_lea.sflag [#allocation6], %s370
        %s372 = sand.u32 %s75, 1
        %s373 = smul.addr %s372, 8
        %s374 = scalar_lea.vmem [#allocation5], %s373
        // Predicated region
        $region57: #{tpu_custom_call.1} parent=55 // pred_check
          %p375 = pneg %p88
        $region58: #{tpu_custom_call.1} parent=55 // pred_check_branch
          %377 = sbr.rel (%p375) target = $region60
        $region59: #{tpu_custom_call.1} parent=55 // pred_region
          %378 = dma.done %s371, 128
        $region60: #{tpu_custom_call.1} parent=55 // pred_fallthru
          _
        // Predicated region
        $region61: #{tpu_custom_call.1} parent=55 // pred_check
          %p379 = pneg %p137
        $region62: #{tpu_custom_call.1} parent=55 // pred_check_branch
          %381 = sbr.rel (%p379) target = $region64
        $region63: #{tpu_custom_call.1} parent=55 // pred_region
          %382 = dma.done [#allocation9], 512
        $region64: #{tpu_custom_call.1} parent=55 // pred_fallthru
          _
        // Predicated region
        $region65: #{tpu_custom_call.1} parent=55 // pred_check
          %p383 = pneg %p179
        $region66: #{tpu_custom_call.1} parent=55 // pred_check_branch
          %385 = sbr.rel (%p383) target = $region68
        $region67: #{tpu_custom_call.1} parent=55 // pred_region
          %386 = dma.done [#allocation9], 256
        $region68: #{tpu_custom_call.1} parent=55 // pred_fallthru
          _
        %p387 = scmp.lt.s32.totalorder %s31, 1
        %s388 = scalar_select %p387, %s31, 1
        %s389 = smul.addr %s388, 8
        %s390 = scalar_lea.vmem %s0, %s389
        %p391 = pneg %p60
        %p392 = pneg %p57
        %s393 = sand.u32 %s75, 1
        %s394 = scalar_lea.sflag [#allocation6], %s393
        %s395 = sand.u32 %s75, 1
        %s396 = smul.addr %s395, 8
        %s397 = scalar_lea.vmem [#allocation5], %s396
        %p398 = pneg %p88
        %p399 = pneg %p85
        %p400 = scmp.lt.s32.totalorder %s31, 1
        %s401 = scalar_select %p400, %s31, 1
        %p402 = scmp.lt.s32.totalorder %s32, 0
        %s403 = scalar_select %p402, %s32, 0
        %s404 = sadd.s32 %s403, %s401
        %s405 = smul.addr %s404, 8
        %s406 = scalar_lea.vmem %s2, %s405
        %p407 = pneg %p116
        %p408 = pneg %p113
        %p409 = pneg %p137
        %p410 = pneg %p134
        %p411 = pneg %p158
        %p412 = pneg %p155
        %p413 = pneg %p179
        %p414 = pneg %p176
        %p415 = pneg %p200
        %p416 = pneg %p197
        %p417 = pneg %p221
        %p418 = pneg %p218
        %p419 = pneg %p242
        %p420 = pneg %p239
        %p421 = pneg %p270
        %p422 = pneg %p267
        %s423 = sand.u32 %s257, 1
        %s424 = scalar_lea.sflag [#allocation7], %s423
        %s425 = sand.u32 %s257, 1
        %s426 = smul.addr %s425, 8
        %s427 = scalar_lea.vmem [#allocation11], %s426
        %p428 = scmp.lt.s32.totalorder %s31, 1
        %s429 = scalar_select %p428, %s31, 1
        %s430 = smul.addr %s429, 8
        %s431 = scalar_lea.vmem %s0, %s430
        %p432 = scmp.lt.s32.totalorder %s31, 1
        %s433 = scalar_select %p432, %s31, 1
        %p434 = scmp.lt.s32.totalorder %s32, 0
        %s435 = scalar_select %p434, %s32, 0
        %s436 = sadd.s32 %s435, %s433
        %s437 = smul.addr %s436, 8
        %s438 = scalar_lea.vmem %s2, %s437
        %s439 = smul.u32 %s32, 8
        %p440 = scmp.eq.s32.totalorder %s32, 0
        // Predicated region
        $region69: #{tpu_custom_call.1} parent=55 // pred_check
          %p441 = pneg %p440
        $region70: #{tpu_custom_call.1} parent=55 // pred_check_branch
          %443 = sbr.rel (%p441) target = $region72
        $region71: #{tpu_custom_call.1} parent=55 // pred_region
          %v444 = vld [vmem:[%s431] sm:$0xff]
          %vm445 = vcmask 261120
          %v446 = vsel %vm445, %v444, 0.0
          %447 = vadd.xlane.f32.xlu0 %v446
          %v448 = vpop.xlane.xlu0 %447
          %v449 = vrcp.pop 32.0
          %v450 = vmul.f32 %v448, %v449
          %v451 = vsub.f32 %v444, %v450
          %v452 = vmul.f32 %v451, %v451
          %v453 = vsel %vm445, %v452, 0.0
          %454 = vadd.xlane.f32.xlu0 %v453
          %v455 = vpop.xlane.xlu0 %454
          %v456 = vmul.f32 %v455, %v449
          %v457 = vadd.f32 %v456, 1e-05
          %v458 = vrsqrt.pop %v457
          %v459 = vmul.f32 %v451, %v458
          %v460 = vld [vmem:[%s7] sm:$0x1]
          %v462 = vlaneseq
          %v463 = vshrl.u32 %v462, 7
          %v464 = vsub.s32 0, %v463
          %v465 = vrot.slane %v460, %v464
          %v467 = vmul.f32 %v459, %v465
          %v468 = vld [vmem:[%s8] sm:$0x1]
          %v470 = vlaneseq
          %v471 = vshrl.u32 %v470, 7
          %v472 = vsub.s32 0, %v471
          %v473 = vrot.slane %v468, %v472
          %v475 = vadd.f32 %v467, %v473
          %v476 = vld [vmem:[#allocation8] sm:$0xff]
          %v477 = vld [vmem:[#allocation8 + $0x8] sm:$0xff]
          %v478 = vld [vmem:[#allocation8 + $0x10] sm:$0xff]
          %v479 = vld [vmem:[#allocation8 + $0x18] sm:$0xff]
          %v480 = vld [vmem:[%s4] sm:$0x1]
          %v482 = vlaneseq
          %v483 = vshrl.u32 %v482, 7
          %v484 = vsub.s32 0, %v483
          %v485 = vrot.slane %v480, %v484
          %v488 = vsel %vm445, %v475, 0
          %490 = vmatprep.subr.mxu0 0.0
          %491 = vmatpush1.msra.mxu0 0.0
          %492 = vmatprep.subr.mxu0 0.0
          %493 = vmatpush1.msra.mxu0 0.0
          %494 = vmatprep.subr.mxu0 0.0
          %495 = vmatpush1.msra.mxu0 0.0
          %496 = vmatprep.subr.mxu0 0.0
          %497 = vmatpush1.msra.mxu0 0.0
          %498 = vmatprep.subr.mxu0 0.0
          %499 = vmatpush1.msra.mxu0 0.0
          %500 = vmatprep.subr.mxu0 0.0
          %501 = vmatpush1.msra.mxu0 0.0
          %502 = vmatprep.subr.mxu0 0.0
          %503 = vmatpush1.msra.mxu0 0.0
          %504 = vmatprep.subr.mxu0 0.0
          %505 = vmatpush1.msra.mxu0 0.0
          %506 = vmatprep.subr.mxu0 0.0
          %507 = vmatpush1.msra.mxu0 0.0
          %508 = vmatprep.subr.mxu0 0.0
          %509 = vmatpush1.msra.mxu0 0.0
          %510 = vmatprep.subr.mxu0 0.0
          %511 = vmatpush1.msra.mxu0 0.0
          %512 = vmatprep.subr.mxu0 0.0
          %513 = vmatpush1.msra.mxu0 0.0
          %514 = vmatprep.subr.mxu0 0.0
          %515 = vmatpush1.msra.mxu0 %v479
          %516 = vmatprep.subr.mxu0 0.0
          %517 = vmatpush1.msra.mxu0 %v478
          %518 = vmatprep.subr.mxu0 0.0
          %519 = vmatpush1.msra.mxu0 %v477
          %520 = vmatprep.subr.mxu0 0.0
          %521 = vmatpush1.msra.mxu0 %v476
          %522 = vmatprep.subr.mxu0 0.0
          %523 = vmatpush2.msra.mxu0 0.0
          %524 = vmatprep.subr.mxu0 0.0
          %525 = vmatpush2.msra.mxu0 0.0
          %526 = vmatprep.subr.mxu0 0.0
          %527 = vmatpush2.msra.mxu0 0.0
          %528 = vmatprep.subr.mxu0 0.0
          %529 = vmatpush2.msra.mxu0 0.0
          %530 = vmatprep.subr.mxu0 0.0
          %531 = vmatpush2.msra.mxu0 0.0
          %532 = vmatprep.subr.mxu0 0.0
          %533 = vmatpush2.msra.mxu0 0.0
          %534 = vmatprep.subr.mxu0 0.0
          %535 = vmatpush2.msra.mxu0 0.0
          %536 = vmatprep.subr.mxu0 0.0
          %537 = vmatpush2.msra.mxu0 0.0
          %538 = vmatprep.subr.mxu0 0.0
          %539 = vmatpush2.msra.mxu0 0.0
          %540 = vmatprep.subr.mxu0 0.0
          %541 = vmatpush2.msra.mxu0 0.0
          %542 = vmatprep.subr.mxu0 0.0
          %543 = vmatpush2.msra.mxu0 0.0
          %544 = vmatprep.subr.mxu0 0.0
          %545 = vmatpush2.msra.mxu0 0.0
          %546 = vmatprep.subr.mxu0 0.0
          %547 = vmatpush2.msra.mxu0 0.0
          %548 = vmatprep.subr.mxu0 0.0
          %549 = vmatpush2.msra.mxu0 0.0
          %550 = vmatprep.subr.mxu0 0.0
          %551 = vmatpush2.msra.mxu0 0.0
          %552 = vmatprep.subr.mxu0 0.0
          %553 = vmatpush2.msra.mxu0 0.0
          %554 = vmatprep.mubr.f32.mxu0 0.0
          %555 = vmatmul.mubr.f32.gmra.mxu0 %v488
          %v556 = vpop.f32.mrf.mxu0
          %v557 = vadd.f32 %v485, %v556
          %v558 = vpop.f32.mrf.mxu0
          %559 = vdwg.mxu0
          %vm560 = vcmask 130048
          %561 = vst.msk [vmem:[#allocation2] sm:$0xff] %vm560, %v557
          %563 = vrot.lane.b32.xlu0 %v557, 112
          %v564 = vpop.permute.xlu0 %563
          %566 = vst.msk [vmem:[#allocation3] sm:$0xff] %vm560, %v564
          %567 = vrot.lane.b32.xlu0 %v557, 96
          %v568 = vpop.permute.xlu0 %567
          %570 = vst.msk [vmem:[#allocation4] sm:$0xff] %vm560, %v568
        $region72: #{tpu_custom_call.1} parent=55 // pred_fallthru
          _
        %s571 = scalar_lea.vmem [#allocation2], %s439
        %v572 = vld [vmem:[%s571] sm:$0xff]
        %v573 = vld [vmem:[#allocation3] sm:$0xff]
        %v574 = vld [vmem:[%s374] sm:$0xff]
        %v575 = vmul.f32 %v574, 0.00055555557
        %vm576 = vcmask 130048
        %v578 = vsel %vm576, %v572, 0
        %v581 = vsel %vm576, %v573, 0
        %583 = vmatprep.subr.mxu0 0.0
        %584 = vmatpush1.xpose.msra.mxu0 0.0
        %585 = vmatprep.subr.mxu0 0.0
        %586 = vmatpush1.xpose.msra.mxu0 0.0
        %587 = vmatprep.subr.mxu0 0.0
        %588 = vmatpush1.xpose.msra.mxu0 0.0
        %589 = vmatprep.subr.mxu0 0.0
        %590 = vmatpush1.xpose.msra.mxu0 0.0
        %591 = vmatprep.subr.mxu0 0.0
        %592 = vmatpush1.xpose.msra.mxu0 0.0
        %593 = vmatprep.subr.mxu0 0.0
        %594 = vmatpush1.xpose.msra.mxu0 0.0
        %595 = vmatprep.subr.mxu0 0.0
        %596 = vmatpush1.xpose.msra.mxu0 0.0
        %597 = vmatprep.subr.mxu0 0.0
        %598 = vmatpush1.xpose.msra.mxu0 0.0
        %599 = vmatprep.subr.mxu0 0.0
        %600 = vmatpush1.xpose.msra.mxu0 0.0
        %601 = vmatprep.subr.mxu0 0.0
        %602 = vmatpush1.xpose.msra.mxu0 0.0
        %603 = vmatprep.subr.mxu0 0.0
        %604 = vmatpush1.xpose.msra.mxu0 0.0
        %605 = vmatprep.subr.mxu0 0.0
        %606 = vmatpush1.xpose.msra.mxu0 0.0
        %607 = vmatprep.subr.mxu0 0.0
        %608 = vmatpush1.xpose.msra.mxu0 0.0
        %609 = vmatprep.subr.mxu0 0.0
        %610 = vmatpush1.xpose.msra.mxu0 0.0
        %611 = vmatprep.subr.mxu0 0.0
        %612 = vmatpush1.xpose.msra.mxu0 0.0
        %613 = vmatprep.subr.mxu0 0.0
        %614 = vmatpush1.xpose.msra.mxu0 %v581
        %615 = vmatprep.subr.mxu0 0.0
        %616 = vmatpush2.xpose.msra.mxu0 0.0
        %617 = vmatprep.subr.mxu0 0.0
        %618 = vmatpush2.xpose.msra.mxu0 0.0
        %619 = vmatprep.subr.mxu0 0.0
        %620 = vmatpush2.xpose.msra.mxu0 0.0
        %621 = vmatprep.subr.mxu0 0.0
        %622 = vmatpush2.xpose.msra.mxu0 0.0
        %623 = vmatprep.subr.mxu0 0.0
        %624 = vmatpush2.xpose.msra.mxu0 0.0
        %625 = vmatprep.subr.mxu0 0.0
        %626 = vmatpush2.xpose.msra.mxu0 0.0
        %627 = vmatprep.subr.mxu0 0.0
        %628 = vmatpush2.xpose.msra.mxu0 0.0
        %629 = vmatprep.subr.mxu0 0.0
        %630 = vmatpush2.xpose.msra.mxu0 0.0
        %631 = vmatprep.subr.mxu0 0.0
        %632 = vmatpush2.xpose.msra.mxu0 0.0
        %633 = vmatprep.subr.mxu0 0.0
        %634 = vmatpush2.xpose.msra.mxu0 0.0
        %635 = vmatprep.subr.mxu0 0.0
        %636 = vmatpush2.xpose.msra.mxu0 0.0
        %637 = vmatprep.subr.mxu0 0.0
        %638 = vmatpush2.xpose.msra.mxu0 0.0
        %639 = vmatprep.subr.mxu0 0.0
        %640 = vmatpush2.xpose.msra.mxu0 0.0
        %641 = vmatprep.subr.mxu0 0.0
        %642 = vmatpush2.xpose.msra.mxu0 0.0
        %643 = vmatprep.subr.mxu0 0.0
        %644 = vmatpush2.xpose.msra.mxu0 0.0
        %645 = vmatprep.subr.mxu0 0.0
        %646 = vmatpush2.xpose.msra.mxu0 0.0
        %647 = vmatprep.mubr.f32.mxu0 0.0
        %648 = vmatmul.mubr.f32.gmra.mxu0 %v578
        %v649 = vpop.f32.mrf.mxu0
        %v650 = vadd.f32 %v575, %v649
        %v651 = vpop.f32.mrf.mxu0
        %652 = vdwg.mxu0
        %vm653 = vcmask 64512
        %v654 = vsel %vm653, %v650, -inf
        %655 = vmax.xlane.f32.xlu0 %v654
        %v656 = vpop.xlane.xlu0 %655
        %v657 = vsub.f32 %v650, %v656
        %v658 = vmul.f32 %v657, 1.442695
        %v659 = vpow.pop %v658
        %v660 = vsel %vm653, %v659, 0.0
        %661 = vadd.xlane.f32.xlu0 %v660
        %v662 = vpop.xlane.xlu0 %661
        %v663 = vrcp.pop %v662
        %v664 = vmul.f32 %v659, %v663
        %v665 = vld [vmem:[#allocation4] sm:$0xff]
        %v667 = vsel %vm653, %v664, 0
        %669 = vmatprep.subr.mxu0 0.0
        %670 = vmatpush1.msra.mxu0 0.0
        %671 = vmatprep.subr.mxu0 0.0
        %672 = vmatpush1.msra.mxu0 0.0
        %673 = vmatprep.subr.mxu0 0.0
        %674 = vmatpush1.msra.mxu0 0.0
        %675 = vmatprep.subr.mxu0 0.0
        %676 = vmatpush1.msra.mxu0 0.0
        %677 = vmatprep.subr.mxu0 0.0
        %678 = vmatpush1.msra.mxu0 0.0
        %679 = vmatprep.subr.mxu0 0.0
        %680 = vmatpush1.msra.mxu0 0.0
        %681 = vmatprep.subr.mxu0 0.0
        %682 = vmatpush1.msra.mxu0 0.0
        %683 = vmatprep.subr.mxu0 0.0
        %684 = vmatpush1.msra.mxu0 0.0
        %685 = vmatprep.subr.mxu0 0.0
        %686 = vmatpush1.msra.mxu0 0.0
        %687 = vmatprep.subr.mxu0 0.0
        %688 = vmatpush1.msra.mxu0 0.0
        %689 = vmatprep.subr.mxu0 0.0
        %690 = vmatpush1.msra.mxu0 0.0
        %691 = vmatprep.subr.mxu0 0.0
        %692 = vmatpush1.msra.mxu0 0.0
        %693 = vmatprep.subr.mxu0 0.0
        %694 = vmatpush1.msra.mxu0 0.0
        %695 = vmatprep.subr.mxu0 0.0
        %696 = vmatpush1.msra.mxu0 0.0
        %697 = vmatprep.subr.mxu0 0.0
        %698 = vmatpush1.msra.mxu0 0.0
        %699 = vmatprep.subr.mxu0 0.0
        %700 = vmatpush1.msra.mxu0 %v665
        %701 = vmatprep.subr.mxu0 0.0
        %702 = vmatpush2.msra.mxu0 0.0
        %703 = vmatprep.subr.mxu0 0.0
        %704 = vmatpush2.msra.mxu0 0.0
        %705 = vmatprep.subr.mxu0 0.0
        %706 = vmatpush2.msra.mxu0 0.0
        %707 = vmatprep.subr.mxu0 0.0
        %708 = vmatpush2.msra.mxu0 0.0
        %709 = vmatprep.subr.mxu0 0.0
        %710 = vmatpush2.msra.mxu0 0.0
        %711 = vmatprep.subr.mxu0 0.0
        %712 = vmatpush2.msra.mxu0 0.0
        %713 = vmatprep.subr.mxu0 0.0
        %714 = vmatpush2.msra.mxu0 0.0
        %715 = vmatprep.subr.mxu0 0.0
        %716 = vmatpush2.msra.mxu0 0.0
        %717 = vmatprep.subr.mxu0 0.0
        %718 = vmatpush2.msra.mxu0 0.0
        %719 = vmatprep.subr.mxu0 0.0
        %720 = vmatpush2.msra.mxu0 0.0
        %721 = vmatprep.subr.mxu0 0.0
        %722 = vmatpush2.msra.mxu0 0.0
        %723 = vmatprep.subr.mxu0 0.0
        %724 = vmatpush2.msra.mxu0 0.0
        %725 = vmatprep.subr.mxu0 0.0
        %726 = vmatpush2.msra.mxu0 0.0
        %727 = vmatprep.subr.mxu0 0.0
        %728 = vmatpush2.msra.mxu0 0.0
        %729 = vmatprep.subr.mxu0 0.0
        %730 = vmatpush2.msra.mxu0 0.0
        %731 = vmatprep.subr.mxu0 0.0
        %732 = vmatpush2.msra.mxu0 0.0
        %733 = vmatprep.mubr.f32.mxu0 0.0
        %734 = vmatmul.mubr.f32.gmra.mxu0 %v667
        %v735 = vpop.f32.mrf.mxu0
        %v736 = vadd.f32 0.0, %v735
        %v737 = vpop.f32.mrf.mxu0
        %738 = vdwg.mxu0
        %v739 = vld [vmem:[#allocation10] sm:$0xff]
        %v740 = vld [vmem:[#allocation10 + $0x8] sm:$0xff]
        %v741 = vld [vmem:[%s6] sm:$0x1]
        %v743 = vlaneseq
        %v744 = vshrl.u32 %v743, 7
        %v745 = vsub.s32 0, %v744
        %v746 = vrot.slane %v741, %v745
        %v749 = vsel %vm576, %v736, 0
        %751 = vmatprep.subr.mxu0 0.0
        %752 = vmatpush1.msra.mxu0 0.0
        %753 = vmatprep.subr.mxu0 0.0
        %754 = vmatpush1.msra.mxu0 0.0
        %755 = vmatprep.subr.mxu0 0.0
        %756 = vmatpush1.msra.mxu0 0.0
        %757 = vmatprep.subr.mxu0 0.0
        %758 = vmatpush1.msra.mxu0 0.0
        %759 = vmatprep.subr.mxu0 0.0
        %760 = vmatpush1.msra.mxu0 0.0
        %761 = vmatprep.subr.mxu0 0.0
        %762 = vmatpush1.msra.mxu0 0.0
        %763 = vmatprep.subr.mxu0 0.0
        %764 = vmatpush1.msra.mxu0 0.0
        %765 = vmatprep.subr.mxu0 0.0
        %766 = vmatpush1.msra.mxu0 0.0
        %767 = vmatprep.subr.mxu0 0.0
        %768 = vmatpush1.msra.mxu0 0.0
        %769 = vmatprep.subr.mxu0 0.0
        %770 = vmatpush1.msra.mxu0 0.0
        %771 = vmatprep.subr.mxu0 0.0
        %772 = vmatpush1.msra.mxu0 0.0
        %773 = vmatprep.subr.mxu0 0.0
        %774 = vmatpush1.msra.mxu0 0.0
        %775 = vmatprep.subr.mxu0 0.0
        %776 = vmatpush1.msra.mxu0 0.0
        %777 = vmatprep.subr.mxu0 0.0
        %778 = vmatpush1.msra.mxu0 0.0
        %779 = vmatprep.subr.mxu0 0.0
        %780 = vmatpush1.msra.mxu0 %v740
        %781 = vmatprep.subr.mxu0 0.0
        %782 = vmatpush1.msra.mxu0 %v739
        %783 = vmatprep.subr.mxu0 0.0
        %784 = vmatpush2.msra.mxu0 0.0
        %785 = vmatprep.subr.mxu0 0.0
        %786 = vmatpush2.msra.mxu0 0.0
        %787 = vmatprep.subr.mxu0 0.0
        %788 = vmatpush2.msra.mxu0 0.0
        %789 = vmatprep.subr.mxu0 0.0
        %790 = vmatpush2.msra.mxu0 0.0
        %791 = vmatprep.subr.mxu0 0.0
        %792 = vmatpush2.msra.mxu0 0.0
        %793 = vmatprep.subr.mxu0 0.0
        %794 = vmatpush2.msra.mxu0 0.0
        %795 = vmatprep.subr.mxu0 0.0
        %796 = vmatpush2.msra.mxu0 0.0
        %797 = vmatprep.subr.mxu0 0.0
        %798 = vmatpush2.msra.mxu0 0.0
        %799 = vmatprep.subr.mxu0 0.0
        %800 = vmatpush2.msra.mxu0 0.0
        %801 = vmatprep.subr.mxu0 0.0
        %802 = vmatpush2.msra.mxu0 0.0
        %803 = vmatprep.subr.mxu0 0.0
        %804 = vmatpush2.msra.mxu0 0.0
        %805 = vmatprep.subr.mxu0 0.0
        %806 = vmatpush2.msra.mxu0 0.0
        %807 = vmatprep.subr.mxu0 0.0
        %808 = vmatpush2.msra.mxu0 0.0
        %809 = vmatprep.subr.mxu0 0.0
        %810 = vmatpush2.msra.mxu0 0.0
        %811 = vmatprep.subr.mxu0 0.0
        %812 = vmatpush2.msra.mxu0 0.0
        %813 = vmatprep.subr.mxu0 0.0
        %814 = vmatpush2.msra.mxu0 0.0
        %815 = vmatprep.mubr.f32.mxu0 0.0
        %816 = vmatmul.mubr.f32.gmra.mxu0 %v749
        %v817 = vpop.f32.mrf.mxu0
        %v818 = vadd.f32 %v746, %v817
        %v819 = vpop.f32.mrf.mxu0
        %820 = vdwg.mxu0
        %s821 = scalar_lea.vmem %s431, %s439
        %v822 = vld [vmem:[%s821] sm:$0xff]
        %v823 = vadd.f32 %v818, %v822
        %v824 = vmul.f32 %v823, 0.70710677
        %v825 = vld [vmem:[%s438] sm:$0xff]
        %827 = vset.pattern.permute.xlu0 0
        %828 = vperm.xlu0 %827, %v825
        %v829 = vpop.permute.xlu0 %828
        %v831 = vmul.f32 %v824, %v829
        %vm832 = vcmask 261120
        %833 = vst.msk [vmem:[%s427] sm:$0xff] %vm832, %v831
        %s834 = sand.u32 %s257, 1
        %s835 = scalar_lea.sflag [#allocation7], %s834
        %s836 = sand.u32 %s257, 1
        %s837 = smul.addr %s836, 8
        %s838 = scalar_lea.vmem [#allocation11], %s837
        // Predicated region
        $region73: #{tpu_custom_call.1} parent=55 // pred_check
          %p839 = pneg %p267
        $region74: #{tpu_custom_call.1} parent=55 // pred_check_branch
          %841 = sbr.rel (%p839) target = $region76
        $region75: #{tpu_custom_call.1} parent=55 // pred_region
          %s843 = ssub.s32 128, 128
          %844 = vsyncadd %s835, %s843
          %s845 = sadd.s32 %s32, %s31
          %s846 = smul.addr %s845, 128
          %s847 = scalar_lea.hbm %s9, %s846
          %s849 = sshll.u32 %s838, 4
          %s850 = int_to_ptr.vmem [resolvable:$true] %s849
          %852 = dma.vmem_to_hbm [thread:$0]  %s850, 128, %s847, %s835
        $region76: #{tpu_custom_call.1} parent=55 // pred_fallthru
          _
      $region56: #{tpu_custom_call.1} parent=5 // pred_fallthru
        _
      %p853 = scmp.le.s32.totalorder 2, %s22
      // Predicated region
      $region77: #{tpu_custom_call.1} parent=5 // pred_check
        %p854 = pneg %p853
      $region78: #{tpu_custom_call.1} parent=5 // pred_check_branch
        %856 = sbr.rel (%p854) target = $region80
      $region79: #{tpu_custom_call.1} parent=5 // pred_region
        %s857 = ssub.s32 %s22, 2
        // Predicated region
        $region81: #{tpu_custom_call.1} parent=79 // pred_check
          %p858 = pneg %p273
        $region82: #{tpu_custom_call.1} parent=79 // pred_check_branch
          %860 = sbr.rel (%p858) target = $region84
        $region83: #{tpu_custom_call.1} parent=79 // pred_region
          %s861 = sand.u32 %s258, 1
          %s862 = scalar_lea.sflag [#allocation7], %s861
          %s863 = sand.u32 %s258, 1
          %s864 = smul.addr %s863, 8
          %s865 = scalar_lea.vmem [#allocation11], %s864
          %866 = dma.done %s862, 128
        $region84: #{tpu_custom_call.1} parent=79 // pred_fallthru
          _
      $region80: #{tpu_custom_call.1} parent=5 // pred_fallthru
        _
    $region6: #{tpu_custom_call.1} parent=1 // loop_footer
      %s26 = sadd.s32 1, %s22
    $region7: #{tpu_custom_call.1} parent=1 // loop_footer_branch
      %21 = sbr.rel target = $region3
    $region8: #{tpu_custom_call.1} parent=1 // loop_exit
      _
    %867 = vsyncpa [#allocation6], 1
    %s868 = scalar_lea.sflag [#allocation6], 1
    %869 = vsyncpa %s868, 1
    %870 = vsyncpa [#allocation9], 1
    %871 = vsyncpa [#allocation7], 1
    %s872 = scalar_lea.sflag [#allocation7], 1
    %873 = vsyncpa %s872, 1

// kernel: tpu_custom_call.1
$region0: #{tpu_custom_call.1}
  #allocation0 [shape = 'u32[]', space=smem, size = 0x4, offset = 0x4, fixed_abs, tag = 'smem constant byte address 0x4 - core index']
  #allocation1 [shape = 'u32[144,128]{1,0:T(1,128)}', space=vmem, size = 0x12000, scoped, tag = 'internal scratch']
  #allocation2 [shape = 'f32[8,16]{1,0:T(8,128)}', space=vmem, size = 0x1000, scoped, tag = 'scratch operand']
  #allocation3 [shape = 'f32[8,16]{1,0:T(8,128)}', space=vmem, size = 0x1000, scoped, tag = 'scratch operand']
  #allocation4 [shape = 'f32[8,16]{1,0:T(8,128)}', space=vmem, size = 0x1000, scoped, tag = 'scratch operand']
  %s0 = inlined_call_operand.vmem [shape: f32[2,8,32], index: 0, kind: input, shape index: {}]
  %s1 = inlined_call_operand.hbm [shape: f32[2,8,8], index: 1, kind: input, shape index: {}]
  %s2 = inlined_call_operand.vmem [shape: f32[2,8,1], index: 2, kind: input, shape index: {}]
  %s3 = inlined_call_operand.hbm [shape: f32[32,48], index: 3, kind: input, shape index: {}]
  %s4 = inlined_call_operand.vmem [shape: f32[1,48], index: 4, kind: input, shape index: {}]
  %s5 = inlined_call_operand.hbm [shape: f32[16,32], index: 5, kind: input, shape index: {}]
  %s6 = inlined_call_operand.vmem [shape: f32[1,32], index: 6, kind: input, shape index: {}]
  %s7 = inlined_call_operand.vmem [shape: f32[1,32], index: 7, kind: input, shape index: {}]
  %s8 = inlined_call_operand.vmem [shape: f32[1,32], index: 8, kind: input, shape index: {}]
  %s9 = inlined_call_operand.hbm [shape: f32[2,8,32], index: 9, kind: output, shape index: {}]
  %s10 = sld [smem:[#allocation0]]
  $region85: #{tpu_custom_call.1} parent=0
    _
  %s12 = ssub.s32 1, %s10
  %s13 = scalar_select 0, %s12, %s10
  $region1: #{tpu_custom_call.1} parent=0
    #allocation5 [shape = 'u8[8192]{0}', space=vmem, size = 0x2000, scoped, tag = 'input window, operand 1']
    #allocation6 [shape = 's32[2]{0}', space=sflag, size = 0x8, scoped, tag = 'scoped memory for tpu_custom_call.1']
    #allocation7 [shape = 's32[2]{0}', space=sflag, size = 0x8, scoped, tag = 'scoped memory for tpu_custom_call.1']
    #allocation8 [shape = 'u8[16384]{0}', space=vmem, size = 0x4000, scoped, tag = 'input window, operand 3, single buffered']
    #allocation9 [shape = 's32[1]{0}', space=sflag, size = 0x4, scoped, tag = 'scoped memory for tpu_custom_call.1']
    #allocation10 [shape = 'u8[8192]{0}', space=vmem, size = 0x2000, scoped, tag = 'input window, operand 5, single buffered']
    #allocation11 [shape = 'u8[8192]{0}', space=vmem, size = 0x2000, scoped, tag = 'output window, operand 0']
    %14 = vsyncpa [#allocation6], 0
    %s15 = scalar_lea.sflag [#allocation6], 1
    %16 = vsyncpa %s15, 0
    %17 = vsyncpa [#allocation9], 0
    %18 = vsyncpa [#allocation7], 0
    %s19 = scalar_lea.sflag [#allocation7], 1
    %20 = vsyncpa %s19, 0
    loop: start=0, step=1, limit=4
    $region2: #{tpu_custom_call.1} parent=1 // loop_pre_header
      _
    $region3: #{tpu_custom_call.1} parent=1 // loop_header
      %s22 = sphi 0, %s26
      %p23 = scmp.ge.s32.totalorder %s22, 4
      %s29 = sphi 0, %s41
      %s30 = sphi 0, %s37
      %s31 = sphi 0, %s29
      %s32 = sphi 0, %s30
      %s33 = sphi 0, %s31
      %s34 = sphi 0, %s32
      %s44 = sphi 0, %s46
      %s47 = sphi 0, %s44
      %s48 = sphi 0, %s47
      %s64 = sphi 0, %s48
      %s72 = sphi 0, %s74
      %s75 = sphi 0, %s72
      %s76 = sphi 0, %s75
      %s92 = sphi 0, %s76
      %s100 = sphi 0, %s102
      %s103 = sphi 0, %s100
      %s104 = sphi 0, %s103
      %s120 = sphi 0, %s104
      %s124 = sphi 0, %s124
      %s126 = sphi 0, %s124
      %s127 = sphi 0, %s126
      %s141 = sphi 0, %s127
      %s145 = sphi 0, %s145
      %s147 = sphi 0, %s145
      %s148 = sphi 0, %s147
      %s162 = sphi 0, %s148
      %s166 = sphi 0, %s166
      %s168 = sphi 0, %s166
      %s169 = sphi 0, %s168
      %s183 = sphi 0, %s169
      %s187 = sphi 0, %s187
      %s189 = sphi 0, %s187
      %s190 = sphi 0, %s189
      %s204 = sphi 0, %s190
      %s208 = sphi 0, %s208
      %s210 = sphi 0, %s208
      %s211 = sphi 0, %s210
      %s225 = sphi 0, %s211
      %s229 = sphi 0, %s229
      %s231 = sphi 0, %s229
      %s232 = sphi 0, %s231
      %s246 = sphi 0, %s232
      %s254 = sphi 0, %s256
      %s257 = sphi 0, %s254
      %s258 = sphi 0, %s257
      %s274 = sphi 0, %s258
    $region4: #{tpu_custom_call.1} parent=1 // loop_header_branch
      %25 = sbr.rel (%p23) target = $region8
    $region5: #{tpu_custom_call.1} parent=1 // loop_body
      %s27 = ssub.s32 %s22, 1
      %s28 = ssub.s32 %s22, 2
      %s35 = sadd.s32 1, %s30
      %p36 = scmp.ge.s32.totalorder %s35, 1
      %s37 = scalar_select %p36, 0, %s35
      %s38 = sadd.s32 1, %s29
      %s39 = scalar_select %p36, %s38, %s29
      %p40 = scmp.ge.s32.totalorder %s39, 2
      %s41 = scalar_select %p40, 0, %s39
      %s42 = ssub.s32 %s29, %s41
      %p43 = scmp.eq.s32.totalorder %s42, 0
      %s45 = sadd.s32 %s44, 1
      %s46 = scalar_select %p43, %s44, %s45
      %p49 = pneg %p43
      %p50 = scmp.eq.s32.totalorder %s22, 1
      %p51 = por %p49, %p50
      %p52 = scmp.ne.s32.totalorder %s44, %s47
      %p53 = scmp.eq.s32.totalorder %s22, 0
      %p54 = por %p52, %p53
      %p55 = scmp.ne.s32.totalorder %s44, %s47
      %p56 = scmp.eq.s32.totalorder %s27, 1
      %p57 = por %p55, %p56
      %p58 = scmp.ne.s32.totalorder %s47, %s48
      %p59 = scmp.eq.s32.totalorder %s27, 0
      %p60 = por %p58, %p59
      %p61 = scmp.ne.s32.totalorder %s47, %s48
      %p62 = scmp.eq.s32.totalorder %s28, 1
      %p63 = por %p61, %p62
      %p65 = scmp.ne.s32.totalorder %s48, %s64
      %p66 = scmp.eq.s32.totalorder %s28, 0
      %p67 = por %p65, %p66
      %s68 = ssub.s32 %s29, %s41
      %s69 = ssub.s32 %s30, %s37
      %s70 = sor.u32 %s68, %s69
      %p71 = scmp.eq.s32.totalorder %s70, 0
      %s73 = sadd.s32 %s72, 1
      %s74 = scalar_select %p71, %s72, %s73
      %p77 = pneg %p71
      %p78 = scmp.eq.s32.totalorder %s22, 1
      %p79 = por %p77, %p78
      %p80 = scmp.ne.s32.totalorder %s72, %s75
      %p81 = scmp.eq.s32.totalorder %s22, 0
      %p82 = por %p80, %p81
      %p83 = scmp.ne.s32.totalorder %s72, %s75
      %p84 = scmp.eq.s32.totalorder %s27, 1
      %p85 = por %p83, %p84
      %p86 = scmp.ne.s32.totalorder %s75, %s76
      %p87 = scmp.eq.s32.totalorder %s27, 0
      %p88 = por %p86, %p87
      %p89 = scmp.ne.s32.totalorder %s75, %s76
      %p90 = scmp.eq.s32.totalorder %s28, 1
      %p91 = por %p89, %p90
      %p93 = scmp.ne.s32.totalorder %s76, %s92
      %p94 = scmp.eq.s32.totalorder %s28, 0
      %p95 = por %p93, %p94
      %s96 = ssub.s32 %s29, %s41
      %s97 = ssub.s32 %s30, %s37
      %s98 = sor.u32 %s96, %s97
      %p99 = scmp.eq.s32.totalorder %s98, 0
      %s101 = sadd.s32 %s100, 1
      %s102 = scalar_select %p99, %s100, %s101
      %p105 = pneg %p99
      %p106 = scmp.eq.s32.totalorder %s22, 1
      %p107 = por %p105, %p106
      %p108 = scmp.ne.s32.totalorder %s100, %s103
      %p109 = scmp.eq.s32.totalorder %s22, 0
      %p110 = por %p108, %p109
      %p111 = scmp.ne.s32.totalorder %s100, %s103
      %p112 = scmp.eq.s32.totalorder %s27, 1
      %p113 = por %p111, %p112
      %p114 = scmp.ne.s32.totalorder %s103, %s104
      %p115 = scmp.eq.s32.totalorder %s27, 0
      %p116 = por %p114, %p115
      %p117 = scmp.ne.s32.totalorder %s103, %s104
      %p118 = scmp.eq.s32.totalorder %s28, 1
      %p119 = por %p117, %p118
      %p121 = scmp.ne.s32.totalorder %s104, %s120
      %p122 = scmp.eq.s32.totalorder %s28, 0
      %p123 = por %p121, %p122
      %s125 = sadd.s32 %s124, 1
      %p128 = scmp.eq.s32.totalorder %s22, 1
      %p129 = scmp.ne.s32.totalorder %s124, %s126
      %p130 = scmp.eq.s32.totalorder %s22, 0
      %p131 = por %p129, %p130
      %p132 = scmp.ne.s32.totalorder %s124, %s126
      %p133 = scmp.eq.s32.totalorder %s27, 1
      %p134 = por %p132, %p133
      %p135 = scmp.ne.s32.totalorder %s126, %s127
      %p136 = scmp.eq.s32.totalorder %s27, 0
      %p137 = por %p135, %p136
      %p138 = scmp.ne.s32.totalorder %s126, %s127
      %p139 = scmp.eq.s32.totalorder %s28, 1
      %p140 = por %p138, %p139
      %p142 = scmp.ne.s32.totalorder %s127, %s141
      %p143 = scmp.eq.s32.totalorder %s28, 0
      %p144 = por %p142, %p143
      %s146 = sadd.s32 %s145, 1
      %p149 = scmp.eq.s32.totalorder %s22, 1
      %p150 = scmp.ne.s32.totalorder %s145, %s147
      %p151 = scmp.eq.s32.totalorder %s22, 0
      %p152 = por %p150, %p151
      %p153 = scmp.ne.s32.totalorder %s145, %s147
      %p154 = scmp.eq.s32.totalorder %s27, 1
      %p155 = por %p153, %p154
      %p156 = scmp.ne.s32.totalorder %s147, %s148
      %p157 = scmp.eq.s32.totalorder %s27, 0
      %p158 = por %p156, %p157
      %p159 = scmp.ne.s32.totalorder %s147, %s148
      %p160 = scmp.eq.s32.totalorder %s28, 1
      %p161 = por %p159, %p160
      %p163 = scmp.ne.s32.totalorder %s148, %s162
      %p164 = scmp.eq.s32.totalorder %s28, 0
      %p165 = por %p163, %p164
      %s167 = sadd.s32 %s166, 1
      %p170 = scmp.eq.s32.totalorder %s22, 1
      %p171 = scmp.ne.s32.totalorder %s166, %s168
      %p172 = scmp.eq.s32.totalorder %s22, 0
      %p173 = por %p171, %p172
      %p174 = scmp.ne.s32.totalorder %s166, %s168
      %p175 = scmp.eq.s32.totalorder %s27, 1
      %p176 = por %p174, %p175
      %p177 = scmp.ne.s32.totalorder %s168, %s169
      %p178 = scmp.eq.s32.totalorder %s27, 0
      %p179 = por %p177, %p178
      %p180 = scmp.ne.s32.totalorder %s168, %s169
      %p181 = scmp.eq.s32.totalorder %s28, 1
      %p182 = por %p180, %p181
      %p184 = scmp.ne.s32.totalorder %s169, %s183
      %p185 = scmp.eq.s32.totalorder %s28, 0
      %p186 = por %p184, %p185
      %s188 = sadd.s32 %s187, 1
      %p191 = scmp.eq.s32.totalorder %s22, 1
      %p192 = scmp.ne.s32.totalorder %s187, %s189
      %p193 = scmp.eq.s32.totalorder %s22, 0
      %p194 = por %p192, %p193
      %p195 = scmp.ne.s32.totalorder %s187, %s189
      %p196 = scmp.eq.s32.totalorder %s27, 1
      %p197 = por %p195, %p196
      %p198 = scmp.ne.s32.totalorder %s189, %s190
      %p199 = scmp.eq.s32.totalorder %s27, 0
      %p200 = por %p198, %p199
      %p201 = scmp.ne.s32.totalorder %s189, %s190
      %p202 = scmp.eq.s32.totalorder %s28, 1
      %p203 = por %p201, %p202
      %p205 = scmp.ne.s32.totalorder %s190, %s204
      %p206 = scmp.eq.s32.totalorder %s28, 0
      %p207 = por %p205, %p206
      %s209 = sadd.s32 %s208, 1
      %p212 = scmp.eq.s32.totalorder %s22, 1
      %p213 = scmp.ne.s32.totalorder %s208, %s210
      %p214 = scmp.eq.s32.totalorder %s22, 0
      %p215 = por %p213, %p214
      %p216 = scmp.ne.s32.totalorder %s208, %s210
      %p217 = scmp.eq.s32.totalorder %s27, 1
      %p218 = por %p216, %p217
      %p219 = scmp.ne.s32.totalorder %s210, %s211
      %p220 = scmp.eq.s32.totalorder %s27, 0
      %p221 = por %p219, %p220
      %p222 = scmp.ne.s32.totalorder %s210, %s211
      %p223 = scmp.eq.s32.totalorder %s28, 1
      %p224 = por %p222, %p223
      %p226 = scmp.ne.s32.totalorder %s211, %s225
      %p227 = scmp.eq.s32.totalorder %s28, 0
      %p228 = por %p226, %p227
      %s230 = sadd.s32 %s229, 1
      %p233 = scmp.eq.s32.totalorder %s22, 1
      %p234 = scmp.ne.s32.totalorder %s229, %s231
      %p235 = scmp.eq.s32.totalorder %s22, 0
      %p236 = por %p234, %p235
      %p237 = scmp.ne.s32.totalorder %s229, %s231
      %p238 = scmp.eq.s32.totalorder %s27, 1
      %p239 = por %p237, %p238
      %p240 = scmp.ne.s32.totalorder %s231, %s232
      %p241 = scmp.eq.s32.totalorder %s27, 0
      %p242 = por %p240, %p241
      %p243 = scmp.ne.s32.totalorder %s231, %s232
      %p244 = scmp.eq.s32.totalorder %s28, 1
      %p245 = por %p243, %p244
      %p247 = scmp.ne.s32.totalorder %s232, %s246
      %p248 = scmp.eq.s32.totalorder %s28, 0
      %p249 = por %p247, %p248
      %s250 = ssub.s32 %s29, %s41
      %s251 = ssub.s32 %s30, %s37
      %s252 = sor.u32 %s250, %s251
      %p253 = scmp.eq.s32.totalorder %s252, 0
      %s255 = sadd.s32 %s254, 1
      %s256 = scalar_select %p253, %s254, %s255
      %p259 = pneg %p253
      %p260 = scmp.eq.s32.totalorder %s22, 1
      %p261 = por %p259, %p260
      %p262 = scmp.ne.s32.totalorder %s254, %s257
      %p263 = scmp.eq.s32.totalorder %s22, 0
      %p264 = por %p262, %p263
      %p265 = scmp.ne.s32.totalorder %s254, %s257
      %p266 = scmp.eq.s32.totalorder %s27, 1
      %p267 = por %p265, %p266
      %p268 = scmp.ne.s32.totalorder %s257, %s258
      %p269 = scmp.eq.s32.totalorder %s27, 0
      %p270 = por %p268, %p269
      %p271 = scmp.ne.s32.totalorder %s257, %s258
      %p272 = scmp.eq.s32.totalorder %s28, 1
      %p273 = por %p271, %p272
      %p275 = scmp.ne.s32.totalorder %s258, %s274
      %p276 = scmp.eq.s32.totalorder %s28, 0
      %p277 = por %p275, %p276
      %p278 = scmp.le.s32.totalorder 1, %s22
      %p279 = scmp.lt.s32.totalorder %s22, 3
      %p280 = pnand %p278, %p279
      %p281 = pneg %p280
      // Predicated region
      $region9: #{tpu_custom_call.1} parent=5 // pred_check
        _
      $region10: #{tpu_custom_call.1} parent=5 // pred_check_branch
        %283 = sbr.rel (%p280) target = $region12
      $region11: #{tpu_custom_call.1} parent=5 // pred_region
        %s284 = ssub.s32 %s22, 1
        // Predicated region
        $region13: #{tpu_custom_call.1} parent=11 // pred_check
          %p285 = pneg %p137
        $region14: #{tpu_custom_call.1} parent=11 // pred_check_branch
          %287 = sbr.rel (%p285) target = $region16
        $region15: #{tpu_custom_call.1} parent=11 // pred_region
          %s289 = ssub.s32 512, 512
          %290 = vsyncadd [#allocation9], %s289
          %s291 = sshll.u32 [#allocation8], 4
          %s292 = int_to_ptr.vmem [resolvable:$true] %s291
          %297 = dma.hbm_to_vmem [thread:$0]  %s3, 512, %s292, [#allocation9], 128, 128, 8
        $region16: #{tpu_custom_call.1} parent=11 // pred_fallthru
          _
        // Predicated region
        $region17: #{tpu_custom_call.1} parent=11 // pred_check
          %p298 = pneg %p158
        $region18: #{tpu_custom_call.1} parent=11 // pred_check_branch
          %300 = sbr.rel (%p298) target = $region20
        $region19: #{tpu_custom_call.1} parent=11 // pred_region
          _
        $region20: #{tpu_custom_call.1} parent=11 // pred_fallthru
          _
        // Predicated region
        $region21: #{tpu_custom_call.1} parent=11 // pred_check
          %p301 = pneg %p179
        $region22: #{tpu_custom_call.1} parent=11 // pred_check_branch
          %303 = sbr.rel (%p301) target = $region24
        $region23: #{tpu_custom_call.1} parent=11 // pred_region
          %s305 = ssub.s32 256, 256
          %306 = vsyncadd [#allocation9], %s305
          %s307 = sshll.u32 [#allocation10], 4
          %s308 = int_to_ptr.vmem [resolvable:$true] %s307
          %313 = dma.hbm_to_vmem [thread:$0]  %s5, 256, %s308, [#allocation9], 128, 128, 8
        $region24: #{tpu_custom_call.1} parent=11 // pred_fallthru
          _
        // Predicated region
        $region25: #{tpu_custom_call.1} parent=11 // pred_check
          %p314 = pneg %p200
        $region26: #{tpu_custom_call.1} parent=11 // pred_check_branch
          %316 = sbr.rel (%p314) target = $region28
        $region27: #{tpu_custom_call.1} parent=11 // pred_region
          _
        $region28: #{tpu_custom_call.1} parent=11 // pred_fallthru
          _
        // Predicated region
        $region29: #{tpu_custom_call.1} parent=11 // pred_check
          %p317 = pneg %p221
        $region30: #{tpu_custom_call.1} parent=11 // pred_check_branch
          %319 = sbr.rel (%p317) target = $region32
        $region31: #{tpu_custom_call.1} parent=11 // pred_region
          _
        $region32: #{tpu_custom_call.1} parent=11 // pred_fallthru
          _
        // Predicated region
        $region33: #{tpu_custom_call.1} parent=11 // pred_check
          %p320 = pneg %p242
        $region34: #{tpu_custom_call.1} parent=11 // pred_check_branch
          %322 = sbr.rel (%p320) target = $region36
        $region35: #{tpu_custom_call.1} parent=11 // pred_region
          _
        $region36: #{tpu_custom_call.1} parent=11 // pred_fallthru
          _
      $region12: #{tpu_custom_call.1} parent=5 // pred_fallthru
        _
      %p323 = scmp.lt.s32.totalorder %s22, 2
      // Predicated region
      $region37: #{tpu_custom_call.1} parent=5 // pred_check
        %p324 = pneg %p323
      $region38: #{tpu_custom_call.1} parent=5 // pred_check_branch
        %326 = sbr.rel (%p324) target = $region40
      $region39: #{tpu_custom_call.1} parent=5 // pred_region
        // Predicated region
        $region41: #{tpu_custom_call.1} parent=39 // pred_check
          %p327 = pneg %p54
        $region42: #{tpu_custom_call.1} parent=39 // pred_check_branch
          %329 = sbr.rel (%p327) target = $region44
        $region43: #{tpu_custom_call.1} parent=39 // pred_region
          %p330 = scmp.lt.s32.totalorder %s29, 1
          %s331 = scalar_select %p330, %s29, 1
          %s332 = smul.addr %s331, 8
          %s333 = scalar_lea.vmem %s0, %s332
        $region44: #{tpu_custom_call.1} parent=39 // pred_fallthru
          _
        // Predicated region
        $region45: #{tpu_custom_call.1} parent=39 // pred_check
          %p334 = pneg %p82
        $region46: #{tpu_custom_call.1} parent=39 // pred_check_branch
          %336 = sbr.rel (%p334) target = $region48
        $region47: #{tpu_custom_call.1} parent=39 // pred_region
          %s337 = sand.u32 %s72, 1
          %s338 = scalar_lea.sflag [#allocation6], %s337
          %s339 = sand.u32 %s72, 1
          %s340 = smul.addr %s339, 8
          %s341 = scalar_lea.vmem [#allocation5], %s340
          %s343 = ssub.s32 128, 128
          %344 = vsyncadd %s338, %s343
          %s345 = sadd.s32 %s30, %s29
          %s346 = smul.addr %s345, 128
          %s347 = scalar_lea.hbm %s1, %s346
          %s349 = sshll.u32 %s341, 4
          %s350 = int_to_ptr.vmem [resolvable:$true] %s349
          %352 = dma.hbm_to_vmem [thread:$0]  %s347, 128, %s350, %s338
        $region48: #{tpu_custom_call.1} parent=39 // pred_fallthru
          _
        // Predicated region
        $region49: #{tpu_custom_call.1} parent=39 // pred_check
          %p353 = pneg %p110
        $region50: #{tpu_custom_call.1} parent=39 // pred_check_branch
          %355 = sbr.rel (%p353) target = $region52
        $region51: #{tpu_custom_call.1} parent=39 // pred_region
          %p356 = scmp.lt.s32.totalorder %s29, 1
          %s357 = scalar_select %p356, %s29, 1
          %p358 = scmp.lt.s32.totalorder %s30, 0
          %s359 = scalar_select %p358, %s30, 0
          %s360 = sadd.s32 %s359, %s357
          %s361 = smul.addr %s360, 8
          %s362 = scalar_lea.vmem %s2, %s361
        $region52: #{tpu_custom_call.1} parent=39 // pred_fallthru
          _
      $region40: #{tpu_custom_call.1} parent=5 // pred_fallthru
        _
      %p363 = scmp.le.s32.totalorder 1, %s22
      %p364 = scmp.lt.s32.totalorder %s22, 3
      %p365 = pnand %p363, %p364
      %p366 = pneg %p365
      // Predicated region
      $region53: #{tpu_custom_call.1} parent=5 // pred_check
        _
      $region54: #{tpu_custom_call.1} parent=5 // pred_check_branch
        %368 = sbr.rel (%p365) target = $region56
      $region55: #{tpu_custom_call.1} parent=5 // pred_region
        %s369 = ssub.s32 %s22, 1
        %s370 = sand.u32 %s75, 1
        %s371 = scalar_lea.sflag [#allocation6], %s370
        %s372 = sand.u32 %s75, 1
        %s373 = smul.addr %s372, 8
        %s374 = scalar_lea.vmem [#allocation5], %s373
        // Predicated region
        $region57: #{tpu_custom_call.1} parent=55 // pred_check
          %p375 = pneg %p88
        $region58: #{tpu_custom_call.1} parent=55 // pred_check_branch
          %377 = sbr.rel (%p375) target = $region60
        $region59: #{tpu_custom_call.1} parent=55 // pred_region
          %378 = dma.done %s371, 128
        $region60: #{tpu_custom_call.1} parent=55 // pred_fallthru
          _
        // Predicated region
        $region61: #{tpu_custom_call.1} parent=55 // pred_check
          %p379 = pneg %p137
        $region62: #{tpu_custom_call.1} parent=55 // pred_check_branch
          %381 = sbr.rel (%p379) target = $region64
        $region63: #{tpu_custom_call.1} parent=55 // pred_region
          %382 = dma.done [#allocation9], 512
        $region64: #{tpu_custom_call.1} parent=55 // pred_fallthru
          _
        // Predicated region
        $region65: #{tpu_custom_call.1} parent=55 // pred_check
          %p383 = pneg %p179
        $region66: #{tpu_custom_call.1} parent=55 // pred_check_branch
          %385 = sbr.rel (%p383) target = $region68
        $region67: #{tpu_custom_call.1} parent=55 // pred_region
          %386 = dma.done [#allocation9], 256
        $region68: #{tpu_custom_call.1} parent=55 // pred_fallthru
          _
        %p387 = scmp.lt.s32.totalorder %s31, 1
        %s388 = scalar_select %p387, %s31, 1
        %s389 = smul.addr %s388, 8
        %s390 = scalar_lea.vmem %s0, %s389
        %p391 = pneg %p60
        %p392 = pneg %p57
        %s393 = sand.u32 %s75, 1
        %s394 = scalar_lea.sflag [#allocation6], %s393
        %s395 = sand.u32 %s75, 1
        %s396 = smul.addr %s395, 8
        %s397 = scalar_lea.vmem [#allocation5], %s396
        %p398 = pneg %p88
        %p399 = pneg %p85
        %p400 = scmp.lt.s32.totalorder %s31, 1
        %s401 = scalar_select %p400, %s31, 1
        %p402 = scmp.lt.s32.totalorder %s32, 0
        %s403 = scalar_select %p402, %s32, 0
        %s404 = sadd.s32 %s403, %s401
        %s405 = smul.addr %s404, 8
        %s406 = scalar_lea.vmem %s2, %s405
        %p407 = pneg %p116
        %p408 = pneg %p113
        %p409 = pneg %p137
        %p410 = pneg %p134
        %p411 = pneg %p158
        %p412 = pneg %p155
        %p413 = pneg %p179
        %p414 = pneg %p176
        %p415 = pneg %p200
        %p416 = pneg %p197
        %p417 = pneg %p221
        %p418 = pneg %p218
        %p419 = pneg %p242
        %p420 = pneg %p239
        %p421 = pneg %p270
        %p422 = pneg %p267
        %s423 = sand.u32 %s257, 1
        %s424 = scalar_lea.sflag [#allocation7], %s423
        %s425 = sand.u32 %s257, 1
        %s426 = smul.addr %s425, 8
        %s427 = scalar_lea.vmem [#allocation11], %s426
        %p428 = scmp.lt.s32.totalorder %s31, 1
        %s429 = scalar_select %p428, %s31, 1
        %s430 = smul.addr %s429, 8
        %s431 = scalar_lea.vmem %s0, %s430
        %p432 = scmp.lt.s32.totalorder %s31, 1
        %s433 = scalar_select %p432, %s31, 1
        %p434 = scmp.lt.s32.totalorder %s32, 0
        %s435 = scalar_select %p434, %s32, 0
        %s436 = sadd.s32 %s435, %s433
        %s437 = smul.addr %s436, 8
        %s438 = scalar_lea.vmem %s2, %s437
        %s439 = smul.u32 %s32, 8
        %p440 = scmp.eq.s32.totalorder %s32, 0
        // Predicated region
        $region69: #{tpu_custom_call.1} parent=55 // pred_check
          %p441 = pneg %p440
        $region70: #{tpu_custom_call.1} parent=55 // pred_check_branch
          %443 = sbr.rel (%p441) target = $region72
        $region71: #{tpu_custom_call.1} parent=55 // pred_region
          %v444 = vld [vmem:[%s431] sm:$0xff]
          %vm445 = vcmask 261120
          %v446 = vsel %vm445, %v444, 0.0
          %447 = vadd.xlane.f32.xlu0 %v446
          %v448 = vpop.xlane.xlu0 %447
          %v449 = vrcp.pop 32.0
          %v450 = vmul.f32 %v448, %v449
          %v451 = vsub.f32 %v444, %v450
          %v452 = vmul.f32 %v451, %v451
          %v453 = vsel %vm445, %v452, 0.0
          %454 = vadd.xlane.f32.xlu0 %v453
          %v455 = vpop.xlane.xlu0 %454
          %v456 = vmul.f32 %v455, %v449
          %v457 = vadd.f32 %v456, 1e-05
          %v458 = vrsqrt.pop %v457
          %v459 = vmul.f32 %v451, %v458
          %v460 = vld [vmem:[%s7] sm:$0x1]
          %v462 = vlaneseq
          %v463 = vshrl.u32 %v462, 7
          %v464 = vsub.s32 0, %v463
          %v465 = vrot.slane %v460, %v464
          %v467 = vmul.f32 %v459, %v465
          %v468 = vld [vmem:[%s8] sm:$0x1]
          %v470 = vlaneseq
          %v471 = vshrl.u32 %v470, 7
          %v472 = vsub.s32 0, %v471
          %v473 = vrot.slane %v468, %v472
          %v475 = vadd.f32 %v467, %v473
          %v476 = vld [vmem:[#allocation8] sm:$0xff]
          %v477 = vld [vmem:[#allocation8 + $0x8] sm:$0xff]
          %v478 = vld [vmem:[#allocation8 + $0x10] sm:$0xff]
          %v479 = vld [vmem:[#allocation8 + $0x18] sm:$0xff]
          %v480 = vld [vmem:[%s4] sm:$0x1]
          %v482 = vlaneseq
          %v483 = vshrl.u32 %v482, 7
          %v484 = vsub.s32 0, %v483
          %v485 = vrot.slane %v480, %v484
          %v488 = vsel %vm445, %v475, 0
          %490 = vmatprep.subr.mxu0 0.0
          %491 = vmatpush1.msra.mxu0 0.0
          %492 = vmatprep.subr.mxu0 0.0
          %493 = vmatpush1.msra.mxu0 0.0
          %494 = vmatprep.subr.mxu0 0.0
          %495 = vmatpush1.msra.mxu0 0.0
          %496 = vmatprep.subr.mxu0 0.0
          %497 = vmatpush1.msra.mxu0 0.0
          %498 = vmatprep.subr.mxu0 0.0
          %499 = vmatpush1.msra.mxu0 0.0
          %500 = vmatprep.subr.mxu0 0.0
          %501 = vmatpush1.msra.mxu0 0.0
          %502 = vmatprep.subr.mxu0 0.0
          %503 = vmatpush1.msra.mxu0 0.0
          %504 = vmatprep.subr.mxu0 0.0
          %505 = vmatpush1.msra.mxu0 0.0
          %506 = vmatprep.subr.mxu0 0.0
          %507 = vmatpush1.msra.mxu0 0.0
          %508 = vmatprep.subr.mxu0 0.0
          %509 = vmatpush1.msra.mxu0 0.0
          %510 = vmatprep.subr.mxu0 0.0
          %511 = vmatpush1.msra.mxu0 0.0
          %512 = vmatprep.subr.mxu0 0.0
          %513 = vmatpush1.msra.mxu0 0.0
          %514 = vmatprep.subr.mxu0 0.0
          %515 = vmatpush1.msra.mxu0 %v479
          %516 = vmatprep.subr.mxu0 0.0
          %517 = vmatpush1.msra.mxu0 %v478
          %518 = vmatprep.subr.mxu0 0.0
          %519 = vmatpush1.msra.mxu0 %v477
          %520 = vmatprep.subr.mxu0 0.0
          %521 = vmatpush1.msra.mxu0 %v476
          %522 = vmatprep.subr.mxu0 0.0
          %523 = vmatpush2.msra.mxu0 0.0
          %524 = vmatprep.subr.mxu0 0.0
          %525 = vmatpush2.msra.mxu0 0.0
          %526 = vmatprep.subr.mxu0 0.0
          %527 = vmatpush2.msra.mxu0 0.0
          %528 = vmatprep.subr.mxu0 0.0
          %529 = vmatpush2.msra.mxu0 0.0
          %530 = vmatprep.subr.mxu0 0.0
          %531 = vmatpush2.msra.mxu0 0.0
          %532 = vmatprep.subr.mxu0 0.0
          %533 = vmatpush2.msra.mxu0 0.0
          %534 = vmatprep.subr.mxu0 0.0
          %535 = vmatpush2.msra.mxu0 0.0
          %536 = vmatprep.subr.mxu0 0.0
          %537 = vmatpush2.msra.mxu0 0.0
          %538 = vmatprep.subr.mxu0 0.0
          %539 = vmatpush2.msra.mxu0 0.0
          %540 = vmatprep.subr.mxu0 0.0
          %541 = vmatpush2.msra.mxu0 0.0
          %542 = vmatprep.subr.mxu0 0.0
          %543 = vmatpush2.msra.mxu0 0.0
          %544 = vmatprep.subr.mxu0 0.0
          %545 = vmatpush2.msra.mxu0 0.0
          %546 = vmatprep.subr.mxu0 0.0
          %547 = vmatpush2.msra.mxu0 0.0
          %548 = vmatprep.subr.mxu0 0.0
          %549 = vmatpush2.msra.mxu0 0.0
          %550 = vmatprep.subr.mxu0 0.0
          %551 = vmatpush2.msra.mxu0 0.0
          %552 = vmatprep.subr.mxu0 0.0
          %553 = vmatpush2.msra.mxu0 0.0
          %554 = vmatprep.mubr.f32.mxu0 0.0
          %555 = vmatmul.mubr.f32.gmra.mxu0 %v488
          %v556 = vpop.f32.mrf.mxu0
          %v557 = vadd.f32 %v485, %v556
          %v558 = vpop.f32.mrf.mxu0
          %559 = vdwg.mxu0
          %vm560 = vcmask 130048
          %561 = vst.msk [vmem:[#allocation2] sm:$0xff] %vm560, %v557
          %563 = vrot.lane.b32.xlu0 %v557, 112
          %v564 = vpop.permute.xlu0 %563
          %566 = vst.msk [vmem:[#allocation3] sm:$0xff] %vm560, %v564
          %567 = vrot.lane.b32.xlu0 %v557, 96
          %v568 = vpop.permute.xlu0 %567
          %570 = vst.msk [vmem:[#allocation4] sm:$0xff] %vm560, %v568
        $region72: #{tpu_custom_call.1} parent=55 // pred_fallthru
          _
        %s571 = scalar_lea.vmem [#allocation2], %s439
        %v572 = vld [vmem:[%s571] sm:$0xff]
        %v573 = vld [vmem:[#allocation3] sm:$0xff]
        %v574 = vld [vmem:[%s374] sm:$0xff]
        %v575 = vmul.f32 %v574, 0.00055555557
        %vm576 = vcmask 130048
        %v578 = vsel %vm576, %v572, 0
        %v581 = vsel %vm576, %v573, 0
        %583 = vmatprep.subr.mxu0 0.0
        %584 = vmatpush1.xpose.msra.mxu0 0.0
        %585 = vmatprep.subr.mxu0 0.0
        %586 = vmatpush1.xpose.msra.mxu0 0.0
        %587 = vmatprep.subr.mxu0 0.0
        %588 = vmatpush1.xpose.msra.mxu0 0.0
        %589 = vmatprep.subr.mxu0 0.0
        %590 = vmatpush1.xpose.msra.mxu0 0.0
        %591 = vmatprep.subr.mxu0 0.0
        %592 = vmatpush1.xpose.msra.mxu0 0.0
        %593 = vmatprep.subr.mxu0 0.0
        %594 = vmatpush1.xpose.msra.mxu0 0.0
        %595 = vmatprep.subr.mxu0 0.0
        %596 = vmatpush1.xpose.msra.mxu0 0.0
        %597 = vmatprep.subr.mxu0 0.0
        %598 = vmatpush1.xpose.msra.mxu0 0.0
        %599 = vmatprep.subr.mxu0 0.0
        %600 = vmatpush1.xpose.msra.mxu0 0.0
        %601 = vmatprep.subr.mxu0 0.0
        %602 = vmatpush1.xpose.msra.mxu0 0.0
        %603 = vmatprep.subr.mxu0 0.0
        %604 = vmatpush1.xpose.msra.mxu0 0.0
        %605 = vmatprep.subr.mxu0 0.0
        %606 = vmatpush1.xpose.msra.mxu0 0.0
        %607 = vmatprep.subr.mxu0 0.0
        %608 = vmatpush1.xpose.msra.mxu0 0.0
        %609 = vmatprep.subr.mxu0 0.0
        %610 = vmatpush1.xpose.msra.mxu0 0.0
        %611 = vmatprep.subr.mxu0 0.0
        %612 = vmatpush1.xpose.msra.mxu0 0.0
        %613 = vmatprep.subr.mxu0 0.0
        %614 = vmatpush1.xpose.msra.mxu0 %v581
        %615 = vmatprep.subr.mxu0 0.0
        %616 = vmatpush2.xpose.msra.mxu0 0.0
        %617 = vmatprep.subr.mxu0 0.0
        %618 = vmatpush2.xpose.msra.mxu0 0.0
        %619 = vmatprep.subr.mxu0 0.0
        %620 = vmatpush2.xpose.msra.mxu0 0.0
        %621 = vmatprep.subr.mxu0 0.0
        %622 = vmatpush2.xpose.msra.mxu0 0.0
        %623 = vmatprep.subr.mxu0 0.0
        %624 = vmatpush2.xpose.msra.mxu0 0.0
        %625 = vmatprep.subr.mxu0 0.0
        %626 = vmatpush2.xpose.msra.mxu0 0.0
        %627 = vmatprep.subr.mxu0 0.0
        %628 = vmatpush2.xpose.msra.mxu0 0.0
        %629 = vmatprep.subr.mxu0 0.0
        %630 = vmatpush2.xpose.msra.mxu0 0.0
        %631 = vmatprep.subr.mxu0 0.0
        %632 = vmatpush2.xpose.msra.mxu0 0.0
        %633 = vmatprep.subr.mxu0 0.0
        %634 = vmatpush2.xpose.msra.mxu0 0.0
        %635 = vmatprep.subr.mxu0 0.0
        %636 = vmatpush2.xpose.msra.mxu0 0.0
        %637 = vmatprep.subr.mxu0 0.0
        %638 = vmatpush2.xpose.msra.mxu0 0.0
        %639 = vmatprep.subr.mxu0 0.0
        %640 = vmatpush2.xpose.msra.mxu0 0.0
        %641 = vmatprep.subr.mxu0 0.0
        %642 = vmatpush2.xpose.msra.mxu0 0.0
        %643 = vmatprep.subr.mxu0 0.0
        %644 = vmatpush2.xpose.msra.mxu0 0.0
        %645 = vmatprep.subr.mxu0 0.0
        %646 = vmatpush2.xpose.msra.mxu0 0.0
        %647 = vmatprep.mubr.f32.mxu0 0.0
        %648 = vmatmul.mubr.f32.gmra.mxu0 %v578
        %v649 = vpop.f32.mrf.mxu0
        %v650 = vadd.f32 %v575, %v649
        %v651 = vpop.f32.mrf.mxu0
        %652 = vdwg.mxu0
        %vm653 = vcmask 64512
        %v654 = vsel %vm653, %v650, -inf
        %655 = vmax.xlane.f32.xlu0 %v654
        %v656 = vpop.xlane.xlu0 %655
        %v657 = vsub.f32 %v650, %v656
        %v658 = vmul.f32 %v657, 1.442695
        %v659 = vpow.pop %v658
        %v660 = vsel %vm653, %v659, 0.0
        %661 = vadd.xlane.f32.xlu0 %v660
        %v662 = vpop.xlane.xlu0 %661
        %v663 = vrcp.pop %v662
        %v664 = vmul.f32 %v659, %v663
        %v665 = vld [vmem:[#allocation4] sm:$0xff]
        %v667 = vsel %vm653, %v664, 0
        %669 = vmatprep.subr.mxu0 0.0
        %670 = vmatpush1.msra.mxu0 0.0
        %671 = vmatprep.subr.mxu0 0.0
        %672 = vmatpush1.msra.mxu0 0.0
        %673 = vmatprep.subr.mxu0 0.0
        %674 = vmatpush1.msra.mxu0 0.0
        %675 = vmatprep.subr.mxu0 0.0
        %676 = vmatpush1.msra.mxu0 0.0
        %677 = vmatprep.subr.mxu0 0.0
        %678 = vmatpush1.msra.mxu0 0.0
        %679 = vmatprep.subr.mxu0 0.0
        %680 = vmatpush1.msra.mxu0 0.0
        %681 = vmatprep.subr.mxu0 0.0
        %682 = vmatpush1.msra.mxu0 0.0
        %683 = vmatprep.subr.mxu0 0.0
        %684 = vmatpush1.msra.mxu0 0.0
        %685 = vmatprep.subr.mxu0 0.0
        %686 = vmatpush1.msra.mxu0 0.0
        %687 = vmatprep.subr.mxu0 0.0
        %688 = vmatpush1.msra.mxu0 0.0
        %689 = vmatprep.subr.mxu0 0.0
        %690 = vmatpush1.msra.mxu0 0.0
        %691 = vmatprep.subr.mxu0 0.0
        %692 = vmatpush1.msra.mxu0 0.0
        %693 = vmatprep.subr.mxu0 0.0
        %694 = vmatpush1.msra.mxu0 0.0
        %695 = vmatprep.subr.mxu0 0.0
        %696 = vmatpush1.msra.mxu0 0.0
        %697 = vmatprep.subr.mxu0 0.0
        %698 = vmatpush1.msra.mxu0 0.0
        %699 = vmatprep.subr.mxu0 0.0
        %700 = vmatpush1.msra.mxu0 %v665
        %701 = vmatprep.subr.mxu0 0.0
        %702 = vmatpush2.msra.mxu0 0.0
        %703 = vmatprep.subr.mxu0 0.0
        %704 = vmatpush2.msra.mxu0 0.0
        %705 = vmatprep.subr.mxu0 0.0
        %706 = vmatpush2.msra.mxu0 0.0
        %707 = vmatprep.subr.mxu0 0.0
        %708 = vmatpush2.msra.mxu0 0.0
        %709 = vmatprep.subr.mxu0 0.0
        %710 = vmatpush2.msra.mxu0 0.0
        %711 = vmatprep.subr.mxu0 0.0
        %712 = vmatpush2.msra.mxu0 0.0
        %713 = vmatprep.subr.mxu0 0.0
        %714 = vmatpush2.msra.mxu0 0.0
        %715 = vmatprep.subr.mxu0 0.0
        %716 = vmatpush2.msra.mxu0 0.0
        %717 = vmatprep.subr.mxu0 0.0
        %718 = vmatpush2.msra.mxu0 0.0
        %719 = vmatprep.subr.mxu0 0.0
        %720 = vmatpush2.msra.mxu0 0.0
        %721 = vmatprep.subr.mxu0 0.0
        %722 = vmatpush2.msra.mxu0 0.0
        %723 = vmatprep.subr.mxu0 0.0
        %724 = vmatpush2.msra.mxu0 0.0
        %725 = vmatprep.subr.mxu0 0.0
        %726 = vmatpush2.msra.mxu0 0.0
        %727 = vmatprep.subr.mxu0 0.0
        %728 = vmatpush2.msra.mxu0 0.0
        %729 = vmatprep.subr.mxu0 0.0
        %730 = vmatpush2.msra.mxu0 0.0
        %731 = vmatprep.subr.mxu0 0.0
        %732 = vmatpush2.msra.mxu0 0.0
        %733 = vmatprep.mubr.f32.mxu0 0.0
        %734 = vmatmul.mubr.f32.gmra.mxu0 %v667
        %v735 = vpop.f32.mrf.mxu0
        %v736 = vadd.f32 0.0, %v735
        %v737 = vpop.f32.mrf.mxu0
        %738 = vdwg.mxu0
        %v739 = vld [vmem:[#allocation10] sm:$0xff]
        %v740 = vld [vmem:[#allocation10 + $0x8] sm:$0xff]
        %v741 = vld [vmem:[%s6] sm:$0x1]
        %v743 = vlaneseq
        %v744 = vshrl.u32 %v743, 7
        %v745 = vsub.s32 0, %v744
        %v746 = vrot.slane %v741, %v745
        %v749 = vsel %vm576, %v736, 0
        %751 = vmatprep.subr.mxu0 0.0
        %752 = vmatpush1.msra.mxu0 0.0
        %753 = vmatprep.subr.mxu0 0.0
        %754 = vmatpush1.msra.mxu0 0.0
        %755 = vmatprep.subr.mxu0 0.0
        %756 = vmatpush1.msra.mxu0 0.0
        %757 = vmatprep.subr.mxu0 0.0
        %758 = vmatpush1.msra.mxu0 0.0
        %759 = vmatprep.subr.mxu0 0.0
        %760 = vmatpush1.msra.mxu0 0.0
        %761 = vmatprep.subr.mxu0 0.0
        %762 = vmatpush1.msra.mxu0 0.0
        %763 = vmatprep.subr.mxu0 0.0
        %764 = vmatpush1.msra.mxu0 0.0
        %765 = vmatprep.subr.mxu0 0.0
        %766 = vmatpush1.msra.mxu0 0.0
        %767 = vmatprep.subr.mxu0 0.0
        %768 = vmatpush1.msra.mxu0 0.0
        %769 = vmatprep.subr.mxu0 0.0
        %770 = vmatpush1.msra.mxu0 0.0
        %771 = vmatprep.subr.mxu0 0.0
        %772 = vmatpush1.msra.mxu0 0.0
        %773 = vmatprep.subr.mxu0 0.0
        %774 = vmatpush1.msra.mxu0 0.0
        %775 = vmatprep.subr.mxu0 0.0
        %776 = vmatpush1.msra.mxu0 0.0
        %777 = vmatprep.subr.mxu0 0.0
        %778 = vmatpush1.msra.mxu0 0.0
        %779 = vmatprep.subr.mxu0 0.0
        %780 = vmatpush1.msra.mxu0 %v740
        %781 = vmatprep.subr.mxu0 0.0
        %782 = vmatpush1.msra.mxu0 %v739
        %783 = vmatprep.subr.mxu0 0.0
        %784 = vmatpush2.msra.mxu0 0.0
        %785 = vmatprep.subr.mxu0 0.0
        %786 = vmatpush2.msra.mxu0 0.0
        %787 = vmatprep.subr.mxu0 0.0
        %788 = vmatpush2.msra.mxu0 0.0
        %789 = vmatprep.subr.mxu0 0.0
        %790 = vmatpush2.msra.mxu0 0.0
        %791 = vmatprep.subr.mxu0 0.0
        %792 = vmatpush2.msra.mxu0 0.0
        %793 = vmatprep.subr.mxu0 0.0
        %794 = vmatpush2.msra.mxu0 0.0
        %795 = vmatprep.subr.mxu0 0.0
        %796 = vmatpush2.msra.mxu0 0.0
        %797 = vmatprep.subr.mxu0 0.0
        %798 = vmatpush2.msra.mxu0 0.0
        %799 = vmatprep.subr.mxu0 0.0
        %800 = vmatpush2.msra.mxu0 0.0
        %801 = vmatprep.subr.mxu0 0.0
        %802 = vmatpush2.msra.mxu0 0.0
        %803 = vmatprep.subr.mxu0 0.0
        %804 = vmatpush2.msra.mxu0 0.0
        %805 = vmatprep.subr.mxu0 0.0
        %806 = vmatpush2.msra.mxu0 0.0
        %807 = vmatprep.subr.mxu0 0.0
        %808 = vmatpush2.msra.mxu0 0.0
        %809 = vmatprep.subr.mxu0 0.0
        %810 = vmatpush2.msra.mxu0 0.0
        %811 = vmatprep.subr.mxu0 0.0
        %812 = vmatpush2.msra.mxu0 0.0
        %813 = vmatprep.subr.mxu0 0.0
        %814 = vmatpush2.msra.mxu0 0.0
        %815 = vmatprep.mubr.f32.mxu0 0.0
        %816 = vmatmul.mubr.f32.gmra.mxu0 %v749
        %v817 = vpop.f32.mrf.mxu0
        %v818 = vadd.f32 %v746, %v817
        %v819 = vpop.f32.mrf.mxu0
        %820 = vdwg.mxu0
        %s821 = scalar_lea.vmem %s431, %s439
        %v822 = vld [vmem:[%s821] sm:$0xff]
        %v823 = vadd.f32 %v818, %v822
        %v824 = vmul.f32 %v823, 0.70710677
        %v825 = vld [vmem:[%s438] sm:$0xff]
        %827 = vset.pattern.permute.xlu0 0
        %828 = vperm.xlu0 %827, %v825
        %v829 = vpop.permute.xlu0 %828
        %v831 = vmul.f32 %v824, %v829
        %vm832 = vcmask 261120
        %833 = vst.msk [vmem:[%s427] sm:$0xff] %vm832, %v831
        %s834 = sand.u32 %s257, 1
        %s835 = scalar_lea.sflag [#allocation7], %s834
        %s836 = sand.u32 %s257, 1
        %s837 = smul.addr %s836, 8
        %s838 = scalar_lea.vmem [#allocation11], %s837
        // Predicated region
        $region73: #{tpu_custom_call.1} parent=55 // pred_check
          %p839 = pneg %p267
        $region74: #{tpu_custom_call.1} parent=55 // pred_check_branch
          %841 = sbr.rel (%p839) target = $region76
        $region75: #{tpu_custom_call.1} parent=55 // pred_region
          %s843 = ssub.s32 128, 128
          %844 = vsyncadd %s835, %s843
          %s845 = sadd.s32 %s32, %s31
          %s846 = smul.addr %s845, 128
          %s847 = scalar_lea.hbm %s9, %s846
          %s849 = sshll.u32 %s838, 4
          %s850 = int_to_ptr.vmem [resolvable:$true] %s849
          %852 = dma.vmem_to_hbm [thread:$0]  %s850, 128, %s847, %s835
        $region76: #{tpu_custom_call.1} parent=55 // pred_fallthru
          _
      $region56: #{tpu_custom_call.1} parent=5 // pred_fallthru
        _
      %p853 = scmp.le.s32.totalorder 2, %s22
      // Predicated region
      $region77: #{tpu_custom_call.1} parent=5 // pred_check
        %p854 = pneg %p853
      $region78: #{tpu_custom_call.1} parent=5 // pred_check_branch
        %856 = sbr.rel (%p854) target = $region80
      $region79: #{tpu_custom_call.1} parent=5 // pred_region
        %s857 = ssub.s32 %s22, 2
        // Predicated region
        $region81: #{tpu_custom_call.1} parent=79 // pred_check
          %p858 = pneg %p273
        $region82: #{tpu_custom_call.1} parent=79 // pred_check_branch
          %860 = sbr.rel (%p858) target = $region84
        $region83: #{tpu_custom_call.1} parent=79 // pred_region
          %s861 = sand.u32 %s258, 1
          %s862 = scalar_lea.sflag [#allocation7], %s861
          %s863 = sand.u32 %s258, 1
          %s864 = smul.addr %s863, 8
          %s865 = scalar_lea.vmem [#allocation11], %s864
          %866 = dma.done %s862, 128
        $region84: #{tpu_custom_call.1} parent=79 // pred_fallthru
          _
      $region80: #{tpu_custom_call.1} parent=5 // pred_fallthru
        _
    $region6: #{tpu_custom_call.1} parent=1 // loop_footer
      %s26 = sadd.s32 1, %s22
    $region7: #{tpu_custom_call.1} parent=1 // loop_footer_branch
      %21 = sbr.rel target = $region3
    $region8: #{tpu_custom_call.1} parent=1 // loop_exit
      _
    %867 = vsyncpa [#allocation6], 1
    %s868 = scalar_lea.sflag [#allocation6], 1
    %869 = vsyncpa %s868, 1
    %870 = vsyncpa [#allocation9], 1
    %871 = vsyncpa [#allocation7], 1
    %s872 = scalar_lea.sflag [#allocation7], 1
    %873 = vsyncpa %s872, 1

</llo_original>
